<compile_context>
chip_gen: v6e
topology: v6e:2x2x1
jax: 0.10.0
libtpu: 0.0.40
codegen_flags: <defaults>
</compile_context>

<pallas_src>
import functools

import numpy as np

import jax
import jax.numpy as jnp
from jax import lax
from jax.experimental import pallas as pl
from jax.experimental.pallas import tpu as pltpu


_HALO = 128      # lane padding on each side of the flattened spatial axis
_SE_COLS = 128   # SE vectors kept 128 lanes wide (MXU/VPU friendly)


# ----------------------------- kernel helpers --------------------------------

def _dw3x3(x, pad_ref, wm_ref, W):
  """Depthwise 3x3 'same' cross-correlation on lane-flattened data.

  x:       (C, n) activations; n = images_per_step * H * W.
  pad_ref: (>=C, _HALO + n + _HALO) shared VMEM scratch, halo strips zeroed.
  wm_ref:  (9, C, n) per-tap weights with BN scale AND boundary masks folded
           in, so each tap costs exactly one mul + one add on the VPU.
  """
  C, n = x.shape
  pad_ref[:C, _HALO:_HALO + n] = x                     # aligned staging store
  acc = x * wm_ref[4]                                  # centre tap, in-register
  for dy in (-1, 0, 1):
    for dx in (-1, 0, 1):
      if dy == 0 and dx == 0:
        continue
      k = (dy + 1) * 3 + (dx + 1)
      off = dy * W + dx
      win = pad_ref[:C, _HALO + off:_HALO + off + n]   # static lane-offset load
      acc = acc + win * wm_ref[k]
  # TODO(synk): pltpu.roll-based variant would keep x in vregs and move the
  # shifts onto the idle XLU; the haloed-window path is kept as it is proven.
  return acc


def _ghost_bottleneck_kernel(
    x_ref, w1p_ref, wm1_ref, w2p_ref, wm2_ref, sewr_ref, sewe_ref,
    pool_ref, bcast_ref, bias_ref,
    o_ref,
    pad_ref,
    *, W, c1, c1b, c2, c2b):
  mid = c1 + c1b
  oup = c2 + c2b

  x = x_ref[...]                                       # (Cin, n); also residual
  n = x.shape[-1]

  # Zero the shared halo strips (cheap; per-step so it is megacore-safe).
  zero = jnp.zeros((pad_ref.shape[0], _HALO), jnp.float32)
  pad_ref[:, :_HALO] = zero
  pad_ref[:, _HALO + n:] = zero

  bias = bias_ref[...]                                 # (max_c, 4)

  # ---- ghost1: primary 1x1 conv (BN scale pre-folded) + bias + ReLU
  x1 = jnp.dot(w1p_ref[...], x, preferred_element_type=jnp.float32)
  x1 = jnp.maximum(x1 + bias[:c1, 0:1], 0.0)           # (c1, n)

  # ---- ghost1: cheap depthwise 3x3 (scale+masks folded into taps) + ReLU
  x2 = _dw3x3(x1, pad_ref, wm1_ref, W)
  x2 = jnp.maximum(x2 + bias[:c1, 1:2], 0.0)           # (c1, n)

  # ---- SqueezeExcite: per-image mean pool / gate broadcast on the idle MXU
  pooled = jnp.concatenate(
      [jnp.dot(x1, pool_ref[...], preferred_element_type=jnp.float32),
       jnp.dot(x2[:c1b], pool_ref[...], preferred_element_type=jnp.float32)],
      axis=0)                                          # (mid, _SE_COLS)
  r = jnp.maximum(
      jnp.dot(sewr_ref[...], pooled, preferred_element_type=jnp.float32), 0.0)
  e = jnp.dot(sewe_ref[...], r, preferred_element_type=jnp.float32)
  gate = jnp.clip(e + 3.0, 0.0, 6.0) * (1.0 / 6.0)     # hard_sigmoid, (mid,128)
  gate_full = jnp.dot(gate, bcast_ref[...],
                      preferred_element_type=jnp.float32)   # (mid, n)

  y1 = x1 * gate_full[:c1]
  y2 = x2[:c1b] * gate_full[c1:mid]

  # ---- ghost2: primary 1x1 conv, K split over (y1, y2) -> no (mid, n) concat
  w2p = w2p_ref[...]
  z1 = (jnp.dot(w2p[:, :c1], y1, preferred_element_type=jnp.float32) +
        jnp.dot(w2p[:, c1:mid], y2, preferred_element_type=jnp.float32))
  z1 = z1 + bias[:c2, 2:3]                             # (c2, n), linear

  # ---- ghost2: cheap depthwise 3x3 (linear)
  z2 = _dw3x3(z1, pad_ref, wm2_ref, W) + bias[:c2, 3:4]

  # ---- identity shortcut fused into two lane-dense sub-slab stores (no concat)
  o_ref[:c2, :] = (z1 + x[:c2]).astype(o_ref.dtype)
  o_ref[c2:oup, :] = (z2[:c2b] + x[c2:oup]).astype(o_ref.dtype)


# ----------------------------- wrapper ---------------------------------------

def _dw_boundary_masks(H, W):
  hh = np.repeat(np.arange(H), W)
  ww = np.tile(np.arange(W), H)
  m = np.zeros((9, H * W), np.float32)
  for dy in (-1, 0, 1):
    for dx in (-1, 0, 1):
      k = (dy + 1) * 3 + (dx + 1)
      valid = ((hh + dy >= 0) & (hh + dy < H) &
               (ww + dx >= 0) & (ww + dx < W))
      m[k] = valid.astype(np.float32)
  return m


def ghost_bottleneck(x_nchw, params, *, grid_steps=None):
  """GhostBottleneck forward.  x_nchw: (N, in_chs, H, W) float32."""
  N, c_in, H, W = x_nchw.shape
  HW = H * W
  g1, g2 = params["ghost1"], params["ghost2"]
  c1, mid = g1["w_primary"].shape[0], g1["oup"]
  c2, oup = g2["w_primary"].shape[0], g2["oup"]
  c1b, c2b = mid - c1, oup - c2
  if c_in != oup:
    # TODO(synk): stride>1 / conv shortcut branch not implemented.
    raise NotImplementedError("identity shortcut requires in_chs == out_chs")

  if grid_steps is None:
    # grid=(2,) keeps both v7x TensorCores busy; pass grid_steps=1 on v5e/v6e
    # to fold the whole batch into a single lane-dense step.
    grid_steps = 2 if (N >= 2 and N % 2 == 0) else 1
  assert N % grid_steps == 0
  ips = N // grid_steps                 # images folded into lanes per grid step
  n = ips * HW
  assert n % 128 == 0 and ips <= _SE_COLS

  # ---- parameter prep (plain XLA, outside the kernel) ------------------------
  # (1) BN scales folded into the 1x1-conv weights.
  w1p = (g1["w_primary"] * g1["scale_primary"]).astype(jnp.float32)
  w2p = (g2["w_primary"] * g2["scale_primary"]).astype(jnp.float32)
  # (2) BN scales + boundary masks folded into the 9 depthwise taps.
  masks = jnp.asarray(np.tile(_dw_boundary_masks(H, W), (1, ips)))     # (9, n)
  wm1 = (g1["scale_cheap"] * g1["w_cheap"]).T[:, :, None] * masks[:, None, :]
  wm2 = (g2["scale_cheap"] * g2["w_cheap"]).T[:, :, None] * masks[:, None, :]
  # (3) four BN biases packed into one (max_c, 4) slab.
  maxc = max(c1, c2)
  def _col(b):
    return jnp.pad(b[:, 0], (0, maxc - b.shape[0]))
  bias = jnp.stack([_col(g1["bias_primary"]), _col(g1["bias_cheap"]),
                    _col(g2["bias_primary"]), _col(g2["bias_cheap"])], axis=1)
  # (4) per-image mean-pool / gate-broadcast matrices (SE runs on the MXU).
  img = np.repeat(np.arange(ips), HW)
  pool_np = np.zeros((n, _SE_COLS), np.float32)
  pool_np[np.arange(n), img] = 1.0 / HW
  bcast_np = np.zeros((_SE_COLS, n), np.float32)
  bcast_np[img, np.arange(n)] = 1.0
  pool, bcast = jnp.asarray(pool_np), jnp.asarray(bcast_np)
  # (5) lane-dense layout: channels on sublanes, (image, pixel) on lanes.
  x_c = jnp.transpose(x_nchw.reshape(N, c_in, HW), (1, 0, 2)).reshape(c_in, N * HW)

  inputs = (x_c, w1p, wm1, w2p, wm2,
            params["se_w_reduce"], params["se_w_expand"], pool, bcast, bias)

  c2map = lambda g: (0, 0)
  c3map = lambda g: (0, 0, 0)
  in_specs = [
      pl.BlockSpec((c_in, n), lambda g: (0, g)),
      pl.BlockSpec(w1p.shape, c2map),
      pl.BlockSpec(wm1.shape, c3map),
      pl.BlockSpec(w2p.shape, c2map),
      pl.BlockSpec(wm2.shape, c3map),
      pl.BlockSpec(params["se_w_reduce"].shape, c2map),
      pl.BlockSpec(params["se_w_expand"].shape, c2map),
      pl.BlockSpec(pool.shape, c2map),
      pl.BlockSpec(bcast.shape, c2map),
      pl.BlockSpec(bias.shape, c2map),
  ]
  out_spec = pl.BlockSpec((oup, n), lambda g: (0, g))

  red = params["se_w_reduce"].shape[0]
  flops = int(2 * N * HW * (c_in * c1 + mid * c2)          # 1x1 convs (MXU)
              + 17 * N * HW * (c1 + c2)                    # depthwise taps (VPU)
              + 2 * grid_steps * _SE_COLS * (2 * mid * n + 2 * red * mid)
              + 4 * N * HW * (mid + oup))                  # gate/bias/residual
  bytes_accessed = int(sum(int(a.size) for a in inputs) * 4 + N * oup * HW * 4)

  kern = functools.partial(_ghost_bottleneck_kernel,
                           W=W, c1=c1, c1b=c1b, c2=c2, c2b=c2b)
  out = pl.pallas_call(
      kern,
      out_shape=jax.ShapeDtypeStruct((oup, N * HW), x_nchw.dtype),
      grid=(grid_steps,),
      in_specs=in_specs,
      out_specs=out_spec,
      scratch_shapes=[pltpu.VMEM((maxc, 2 * _HALO + n), jnp.float32)],
      compiler_params=pltpu.CompilerParams(
          dimension_semantics=("parallel",)),
      cost_estimate=pl.CostEstimate(
          flops=flops, transcendentals=0, bytes_accessed=bytes_accessed),
  )(*inputs)
  return jnp.transpose(out.reshape(oup, N, HW), (1, 0, 2)).reshape(N, oup, H, W)


# ----------------------------- parameters ------------------------------------

def _make_divisible(v, divisor, min_value=None):
  if min_value is None:
    min_value = divisor
  new_v = max(min_value, int(v + divisor / 2) // divisor * divisor)
  if new_v < 0.9 * v:
    new_v += divisor
  return new_v


def make_bn_fold(key, c):
  k1, k2, k3, k4 = jax.random.split(key, 4)
  gamma = jax.random.uniform(k1, (c,), minval=0.5, maxval=1.5)
  beta = 0.1 * jax.random.normal(k2, (c,))
  mean = 0.1 * jax.random.normal(k3, (c,))
  var = jax.random.uniform(k4, (c,), minval=0.5, maxval=1.5)
  scale = gamma * lax.rsqrt(var + 1e-5)
  bias = beta - mean * scale
  return (scale.reshape(-1, 1).astype(jnp.float32),
          bias.reshape(-1, 1).astype(jnp.float32))


def make_ghost_params(key, inp, oup):
  init_c = -(-oup // 2)                       # math.ceil(oup / ratio), ratio=2
  k1, k2, k3, k4 = jax.random.split(key, 4)
  w_primary = (jax.random.normal(k1, (init_c, inp)) /
               jnp.sqrt(float(inp))).astype(jnp.float32)   # (out, in) 1x1 conv
  w_cheap = (jax.random.normal(k2, (init_c, 9)) / 3.0).astype(jnp.float32)
  sp, bp = make_bn_fold(k3, init_c)
  sc, bc = make_bn_fold(k4, init_c)
  return dict(w_primary=w_primary, scale_primary=sp, bias_primary=bp,
              w_cheap=w_cheap, scale_cheap=sc, bias_cheap=bc, oup=oup)


def make_params(key, in_chs, mid_chs, out_chs, se_ratio=0.25):
  k1, k2, k3, k4 = jax.random.split(key, 4)
  reduced = _make_divisible(mid_chs * se_ratio, 4)
  return dict(
      ghost1=make_ghost_params(k1, in_chs, mid_chs),
      ghost2=make_ghost_params(k2, mid_chs, out_chs),
      se_w_reduce=(jax.random.normal(k3, (reduced, mid_chs)) /
                   jnp.sqrt(float(mid_chs))).astype(jnp.float32),
      se_w_expand=(jax.random.normal(k4, (mid_chs, reduced)) /
                   jnp.sqrt(float(reduced))).astype(jnp.float32),
  )


# ----------------------------- pure-JAX reference ----------------------------

def reference_ghost_bottleneck(x_nhwc, params):
  hp = lax.Precision.HIGHEST

  def pw(x, w_oi, scale, bias, relu):
    y = jnp.einsum("nhwc,oc->nhwo", x, w_oi, precision=hp)
    y = y * scale[:, 0] + bias[:, 0]
    return jnp.maximum(y, 0.0) if relu else y

  def dw(x, w_c9, scale, bias, relu):
    c = x.shape[-1]
    w_hwio = jnp.transpose(w_c9.reshape(c, 3, 3), (1, 2, 0))[:, :, None, :]
    y = lax.conv_general_dilated(
        x, w_hwio, window_strides=(1, 1), padding="SAME",
        feature_group_count=c,
        dimension_numbers=("NHWC", "HWIO", "NHWC"), precision=hp)
    y = y * scale[:, 0] + bias[:, 0]
    return jnp.maximum(y, 0.0) if relu else y

  def ghost(x, p, relu):
    x1 = pw(x, p["w_primary"], p["scale_primary"], p["bias_primary"], relu)
    x2 = dw(x1, p["w_cheap"], p["scale_cheap"], p["bias_cheap"], relu)
    return jnp.concatenate([x1, x2], axis=-1)[..., :p["oup"]]

  y = ghost(x_nhwc, params["ghost1"], True)
  pooled = jnp.mean(y, axis=(1, 2))                                   # (N, mid)
  r = jnp.maximum(
      jnp.einsum("nc,rc->nr", pooled, params["se_w_reduce"], precision=hp), 0.0)
  e = jnp.einsum("nr,cr->nc", r, params["se_w_expand"], precision=hp)
  gate = jnp.clip(e + 3.0, 0.0, 6.0) / 6.0
  y = y * gate[:, None, None, :]
  y = ghost(y, params["ghost2"], False)
  return y + x_nhwc


# ----------------------------- main -------------------------------------------

if __name__ == "__main__":
  key = jax.random.PRNGKey(0)
  k_x, k_p = jax.random.split(key)

  N, H, W = 2, 16, 16
  in_chs, mid_chs, out_chs = 16, 32, 16    # in==out, stride=1 -> identity shortcut

  params = make_params(k_p, in_chs, mid_chs, out_chs, se_ratio=0.25)

  # PyTorch-convention NCHW input.
  x_nchw = jax.random.normal(k_x, (N, in_chs, H, W), jnp.float32)

  out_nchw = ghost_bottleneck(x_nchw, params)
  jax.block_until_ready(out_nchw)

  # Pure-JAX reference (NHWC) for verification.
  x_nhwc = jnp.transpose(x_nchw, (0, 2, 3, 1))
  ref_nhwc = reference_ghost_bottleneck(x_nhwc, params)
  ref_nchw = jnp.transpose(ref_nhwc, (0, 3, 1, 2))

  assert out_nchw.shape == (N, out_chs, H, W)
  err = float(jnp.max(jnp.abs(out_nchw - ref_nchw)))
  assert jnp.allclose(out_nchw, ref_nchw, atol=3e-3, rtol=3e-3), err
  print("KERNEL_OK")
</pallas_src>

<mosaic_0001>
module attributes {stable_mosaic.version = 11 : i64} {
  func.func @_ghost_bottleneck_kernel(%arg0: i32, %arg1: memref<16x256xf32, #tpu.memory_space<vmem>>, %arg2: memref<16x16xf32, #tpu.memory_space<vmem>>, %arg3: memref<9x16x256xf32, #tpu.memory_space<vmem>>, %arg4: memref<8x32xf32, #tpu.memory_space<vmem>>, %arg5: memref<9x8x256xf32, #tpu.memory_space<vmem>>, %arg6: memref<8x32xf32, #tpu.memory_space<vmem>>, %arg7: memref<32x8xf32, #tpu.memory_space<vmem>>, %arg8: memref<256x128xf32, #tpu.memory_space<vmem>>, %arg9: memref<128x256xf32, #tpu.memory_space<vmem>>, %arg10: memref<16x4xf32, #tpu.memory_space<vmem>>, %arg11: memref<16x256xf32, #tpu.memory_space<vmem>>, %arg12: memref<16x512xf32, #tpu.memory_space<vmem>>) attributes {dimension_semantics = [#tpu.dimension_semantics<parallel>], iteration_bounds = array<i64: 2>, scalar_prefetch = 0 : i64, scratch_operands = 1 : i64, tpu.core_type = #tpu.core_type<tc>, window_params = [{transform_indices = @transform_0, window_bounds = array<i64: 16, 256>}, {pipeline_mode = #tpu.pipeline_mode<synchronous>, transform_indices = @transform_1, window_bounds = array<i64: 16, 16>}, {pipeline_mode = #tpu.pipeline_mode<synchronous>, transform_indices = @transform_2, window_bounds = array<i64: 9, 16, 256>}, {pipeline_mode = #tpu.pipeline_mode<synchronous>, transform_indices = @transform_3, window_bounds = array<i64: 8, 32>}, {pipeline_mode = #tpu.pipeline_mode<synchronous>, transform_indices = @transform_4, window_bounds = array<i64: 9, 8, 256>}, {pipeline_mode = #tpu.pipeline_mode<synchronous>, transform_indices = @transform_5, window_bounds = array<i64: 8, 32>}, {pipeline_mode = #tpu.pipeline_mode<synchronous>, transform_indices = @transform_6, window_bounds = array<i64: 32, 8>}, {pipeline_mode = #tpu.pipeline_mode<synchronous>, transform_indices = @transform_7, window_bounds = array<i64: 256, 128>}, {pipeline_mode = #tpu.pipeline_mode<synchronous>, transform_indices = @transform_8, window_bounds = array<i64: 128, 256>}, {pipeline_mode = #tpu.pipeline_mode<synchronous>, transform_indices = @transform_9, window_bounds = array<i64: 16, 4>}, {transform_indices = @transform_10, window_bounds = array<i64: 16, 256>}]} {
    %c0 = arith.constant 0 : index
    %c0_0 = arith.constant 0 : index
    %0 = vector.load %arg1[%c0, %c0_0] : memref<16x256xf32, #tpu.memory_space<vmem>>, vector<16x256xf32>
    %cst = arith.constant 0.000000e+00 : f32
    %1 = vector.broadcast %cst : f32 to vector<16x128xf32>
    %c0_1 = arith.constant 0 : index
    %c0_2 = arith.constant 0 : index
    %2 = vector.load %arg12[%c0_1, %c0_2] : memref<16x512xf32, #tpu.memory_space<vmem>>, vector<16x128xf32>
    tpu.vector_store %arg12[%c0_1, %c0_2], %1 {strides = array<i32>} : memref<16x512xf32, #tpu.memory_space<vmem>>, vector<16x128xf32>,
    %c0_3 = arith.constant 0 : index
    %c384 = arith.constant 384 : index
    %3 = vector.load %arg12[%c0_3, %c384] : memref<16x512xf32, #tpu.memory_space<vmem>>, vector<16x128xf32>
    tpu.vector_store %arg12[%c0_3, %c384], %1 {strides = array<i32>} : memref<16x512xf32, #tpu.memory_space<vmem>>, vector<16x128xf32>,
    %c0_4 = arith.constant 0 : index
    %c0_5 = arith.constant 0 : index
    %4 = vector.load %arg10[%c0_4, %c0_5] : memref<16x4xf32, #tpu.memory_space<vmem>>, vector<16x4xf32>
    %c0_6 = arith.constant 0 : index
    %c0_7 = arith.constant 0 : index
    %5 = vector.load %arg2[%c0_6, %c0_7] : memref<16x16xf32, #tpu.memory_space<vmem>>, vector<16x16xf32>
    %cst_8 = arith.constant dense<0.000000e+00> : vector<16x256xf32>
    %6 = tpu.matmul %5, %0, %cst_8 {dimension_numbers = #tpu.dot_dimension_numbers<[1], [0], [0], [1], [0, 0, 1, 1], [], []>} : vector<16x16xf32>, vector<16x256xf32>, vector<16x256xf32> -> vector<16x256xf32>
    %7 = vector.extract_strided_slice %4 {offsets = [0, 0], sizes = [16, 1], strides = [1, 1]} : vector<16x4xf32> to vector<16x1xf32>
    %8 = vector.broadcast %7 : vector<16x1xf32> to vector<16x256xf32>
    %9 = arith.addf %6, %8 : vector<16x256xf32>
    %cst_9 = arith.constant 0.000000e+00 : f32
    %10 = vector.broadcast %cst_9 : f32 to vector<16x256xf32>
    %11 = arith.maximumf %9, %10 : vector<16x256xf32>
    %c0_10 = arith.constant 0 : index
    %c128 = arith.constant 128 : index
    %12 = vector.load %arg12[%c0_10, %c128] : memref<16x512xf32, #tpu.memory_space<vmem>>, vector<16x256xf32>
    tpu.vector_store %arg12[%c0_10, %c128], %11 {strides = array<i32>} : memref<16x512xf32, #tpu.memory_space<vmem>>, vector<16x256xf32>,
    %c4 = arith.constant 4 : index
    %c0_11 = arith.constant 0 : index
    %c0_12 = arith.constant 0 : index
    %13 = vector.load %arg3[%c4, %c0_11, %c0_12] : memref<9x16x256xf32, #tpu.memory_space<vmem>>, vector<1x16x256xf32>
    %14 = vector.shape_cast %13 : vector<1x16x256xf32> to vector<16x256xf32>
    %15 = arith.mulf %11, %14 : vector<16x256xf32>
    %c0_13 = arith.constant 0 : index
    %c111 = arith.constant 111 : index
    %16 = vector.load %arg12[%c0_13, %c111] : memref<16x512xf32, #tpu.memory_space<vmem>>, vector<16x256xf32>
    %c0_14 = arith.constant 0 : index
    %c0_15 = arith.constant 0 : index
    %c0_16 = arith.constant 0 : index
    %17 = vector.load %arg3[%c0_14, %c0_15, %c0_16] : memref<9x16x256xf32, #tpu.memory_space<vmem>>, vector<1x16x256xf32>
    %18 = vector.shape_cast %17 : vector<1x16x256xf32> to vector<16x256xf32>
    %19 = arith.mulf %16, %18 : vector<16x256xf32>
    %20 = arith.addf %15, %19 : vector<16x256xf32>
    %c0_17 = arith.constant 0 : index
    %c112 = arith.constant 112 : index
    %21 = vector.load %arg12[%c0_17, %c112] : memref<16x512xf32, #tpu.memory_space<vmem>>, vector<16x256xf32>
    %c1 = arith.constant 1 : index
    %c0_18 = arith.constant 0 : index
    %c0_19 = arith.constant 0 : index
    %22 = vector.load %arg3[%c1, %c0_18, %c0_19] : memref<9x16x256xf32, #tpu.memory_space<vmem>>, vector<1x16x256xf32>
    %23 = vector.shape_cast %22 : vector<1x16x256xf32> to vector<16x256xf32>
    %24 = arith.mulf %21, %23 : vector<16x256xf32>
    %25 = arith.addf %20, %24 : vector<16x256xf32>
    %c0_20 = arith.constant 0 : index
    %c113 = arith.constant 113 : index
    %26 = vector.load %arg12[%c0_20, %c113] : memref<16x512xf32, #tpu.memory_space<vmem>>, vector<16x256xf32>
    %c2 = arith.constant 2 : index
    %c0_21 = arith.constant 0 : index
    %c0_22 = arith.constant 0 : index
    %27 = vector.load %arg3[%c2, %c0_21, %c0_22] : memref<9x16x256xf32, #tpu.memory_space<vmem>>, vector<1x16x256xf32>
    %28 = vector.shape_cast %27 : vector<1x16x256xf32> to vector<16x256xf32>
    %29 = arith.mulf %26, %28 : vector<16x256xf32>
    %30 = arith.addf %25, %29 : vector<16x256xf32>
    %c0_23 = arith.constant 0 : index
    %c127 = arith.constant 127 : index
    %31 = vector.load %arg12[%c0_23, %c127] : memref<16x512xf32, #tpu.memory_space<vmem>>, vector<16x256xf32>
    %c3 = arith.constant 3 : index
    %c0_24 = arith.constant 0 : index
    %c0_25 = arith.constant 0 : index
    %32 = vector.load %arg3[%c3, %c0_24, %c0_25] : memref<9x16x256xf32, #tpu.memory_space<vmem>>, vector<1x16x256xf32>
    %33 = vector.shape_cast %32 : vector<1x16x256xf32> to vector<16x256xf32>
    %34 = arith.mulf %31, %33 : vector<16x256xf32>
    %35 = arith.addf %30, %34 : vector<16x256xf32>
    %c0_26 = arith.constant 0 : index
    %c129 = arith.constant 129 : index
    %36 = vector.load %arg12[%c0_26, %c129] : memref<16x512xf32, #tpu.memory_space<vmem>>, vector<16x256xf32>
    %c5 = arith.constant 5 : index
    %c0_27 = arith.constant 0 : index
    %c0_28 = arith.constant 0 : index
    %37 = vector.load %arg3[%c5, %c0_27, %c0_28] : memref<9x16x256xf32, #tpu.memory_space<vmem>>, vector<1x16x256xf32>
    %38 = vector.shape_cast %37 : vector<1x16x256xf32> to vector<16x256xf32>
    %39 = arith.mulf %36, %38 : vector<16x256xf32>
    %40 = arith.addf %35, %39 : vector<16x256xf32>
    %c0_29 = arith.constant 0 : index
    %c143 = arith.constant 143 : index
    %41 = vector.load %arg12[%c0_29, %c143] : memref<16x512xf32, #tpu.memory_space<vmem>>, vector<16x256xf32>
    %c6 = arith.constant 6 : index
    %c0_30 = arith.constant 0 : index
    %c0_31 = arith.constant 0 : index
    %42 = vector.load %arg3[%c6, %c0_30, %c0_31] : memref<9x16x256xf32, #tpu.memory_space<vmem>>, vector<1x16x256xf32>
    %43 = vector.shape_cast %42 : vector<1x16x256xf32> to vector<16x256xf32>
    %44 = arith.mulf %41, %43 : vector<16x256xf32>
    %45 = arith.addf %40, %44 : vector<16x256xf32>
    %c0_32 = arith.constant 0 : index
    %c144 = arith.constant 144 : index
    %46 = vector.load %arg12[%c0_32, %c144] : memref<16x512xf32, #tpu.memory_space<vmem>>, vector<16x256xf32>
    %c7 = arith.constant 7 : index
    %c0_33 = arith.constant 0 : index
    %c0_34 = arith.constant 0 : index
    %47 = vector.load %arg3[%c7, %c0_33, %c0_34] : memref<9x16x256xf32, #tpu.memory_space<vmem>>, vector<1x16x256xf32>
    %48 = vector.shape_cast %47 : vector<1x16x256xf32> to vector<16x256xf32>
    %49 = arith.mulf %46, %48 : vector<16x256xf32>
    %50 = arith.addf %45, %49 : vector<16x256xf32>
    %c0_35 = arith.constant 0 : index
    %c145 = arith.constant 145 : index
    %51 = vector.load %arg12[%c0_35, %c145] : memref<16x512xf32, #tpu.memory_space<vmem>>, vector<16x256xf32>
    %c8 = arith.constant 8 : index
    %c0_36 = arith.constant 0 : index
    %c0_37 = arith.constant 0 : index
    %52 = vector.load %arg3[%c8, %c0_36, %c0_37] : memref<9x16x256xf32, #tpu.memory_space<vmem>>, vector<1x16x256xf32>
    %53 = vector.shape_cast %52 : vector<1x16x256xf32> to vector<16x256xf32>
    %54 = arith.mulf %51, %53 : vector<16x256xf32>
    %55 = arith.addf %50, %54 : vector<16x256xf32>
    %56 = vector.extract_strided_slice %4 {offsets = [0, 1], sizes = [16, 1], strides = [1, 1]} : vector<16x4xf32> to vector<16x1xf32>
    %57 = vector.broadcast %56 : vector<16x1xf32> to vector<16x256xf32>
    %58 = arith.addf %55, %57 : vector<16x256xf32>
    %cst_38 = arith.constant 0.000000e+00 : f32
    %59 = vector.broadcast %cst_38 : f32 to vector<16x256xf32>
    %60 = arith.maximumf %58, %59 : vector<16x256xf32>
    %c0_39 = arith.constant 0 : index
    %c0_40 = arith.constant 0 : index
    %61 = vector.load %arg8[%c0_39, %c0_40] : memref<256x128xf32, #tpu.memory_space<vmem>>, vector<256x128xf32>
    %cst_41 = arith.constant dense<0.000000e+00> : vector<16x128xf32>
    %62 = tpu.matmul %11, %61, %cst_41 {dimension_numbers = #tpu.dot_dimension_numbers<[1], [0], [0], [1], [0, 0, 1, 1], [], []>} : vector<16x256xf32>, vector<256x128xf32>, vector<16x128xf32> -> vector<16x128xf32>
    %c0_42 = arith.constant 0 : index
    %c0_43 = arith.constant 0 : index
    %63 = vector.load %arg8[%c0_42, %c0_43] : memref<256x128xf32, #tpu.memory_space<vmem>>, vector<256x128xf32>
    %cst_44 = arith.constant dense<0.000000e+00> : vector<16x128xf32>
    %64 = tpu.matmul %60, %63, %cst_44 {dimension_numbers = #tpu.dot_dimension_numbers<[1], [0], [0], [1], [0, 0, 1, 1], [], []>} : vector<16x256xf32>, vector<256x128xf32>, vector<16x128xf32> -> vector<16x128xf32>
    %65 = tpu.concatenate %62, %64 in 0 : vector<16x128xf32>, vector<16x128xf32> -> vector<32x128xf32>
    %c0_45 = arith.constant 0 : index
    %c0_46 = arith.constant 0 : index
    %66 = vector.load %arg6[%c0_45, %c0_46] : memref<8x32xf32, #tpu.memory_space<vmem>>, vector<8x32xf32>
    %cst_47 = arith.constant dense<0.000000e+00> : vector<8x128xf32>
    %67 = tpu.matmul %66, %65, %cst_47 {dimension_numbers = #tpu.dot_dimension_numbers<[1], [0], [0], [1], [0, 0, 1, 1], [], []>} : vector<8x32xf32>, vector<32x128xf32>, vector<8x128xf32> -> vector<8x128xf32>
    %cst_48 = arith.constant 0.000000e+00 : f32
    %68 = vector.broadcast %cst_48 : f32 to vector<8x128xf32>
    %69 = arith.maximumf %67, %68 : vector<8x128xf32>
    %c0_49 = arith.constant 0 : index
    %c0_50 = arith.constant 0 : index
    %70 = vector.load %arg7[%c0_49, %c0_50] : memref<32x8xf32, #tpu.memory_space<vmem>>, vector<32x8xf32>
    %cst_51 = arith.constant dense<0.000000e+00> : vector<32x128xf32>
    %71 = tpu.matmul %70, %69, %cst_51 {dimension_numbers = #tpu.dot_dimension_numbers<[1], [0], [0], [1], [0, 0, 1, 1], [], []>} : vector<32x8xf32>, vector<8x128xf32>, vector<32x128xf32> -> vector<32x128xf32>
    %cst_52 = arith.constant 3.000000e+00 : f32
    %72 = vector.broadcast %cst_52 : f32 to vector<32x128xf32>
    %73 = arith.addf %71, %72 : vector<32x128xf32>
    %cst_53 = arith.constant 0.000000e+00 : f32
    %cst_54 = arith.constant 6.000000e+00 : f32
    %74 = vector.broadcast %cst_53 : f32 to vector<32x128xf32>
    %75 = arith.maximumf %74, %73 : vector<32x128xf32>
    %76 = vector.broadcast %cst_54 : f32 to vector<32x128xf32>
    %77 = arith.minimumf %76, %75 : vector<32x128xf32>
    %cst_55 = arith.constant 0.166666672 : f32
    %78 = vector.broadcast %cst_55 : f32 to vector<32x128xf32>
    %79 = arith.mulf %77, %78 : vector<32x128xf32>
    %c0_56 = arith.constant 0 : index
    %c0_57 = arith.constant 0 : index
    %80 = vector.load %arg9[%c0_56, %c0_57] : memref<128x256xf32, #tpu.memory_space<vmem>>, vector<128x256xf32>
    %cst_58 = arith.constant dense<0.000000e+00> : vector<32x256xf32>
    %81 = tpu.matmul %79, %80, %cst_58 {dimension_numbers = #tpu.dot_dimension_numbers<[1], [0], [0], [1], [0, 0, 1, 1], [], []>} : vector<32x128xf32>, vector<128x256xf32>, vector<32x256xf32> -> vector<32x256xf32>
    %82 = vector.extract_strided_slice %81 {offsets = [0, 0], sizes = [16, 256], strides = [1, 1]} : vector<32x256xf32> to vector<16x256xf32>
    %83 = arith.mulf %11, %82 : vector<16x256xf32>
    %84 = vector.extract_strided_slice %81 {offsets = [16, 0], sizes = [16, 256], strides = [1, 1]} : vector<32x256xf32> to vector<16x256xf32>
    %85 = arith.mulf %60, %84 : vector<16x256xf32>
    %c0_59 = arith.constant 0 : index
    %c0_60 = arith.constant 0 : index
    %86 = vector.load %arg4[%c0_59, %c0_60] : memref<8x32xf32, #tpu.memory_space<vmem>>, vector<8x32xf32>
    %87 = vector.extract_strided_slice %86 {offsets = [0, 0], sizes = [8, 16], strides = [1, 1]} : vector<8x32xf32> to vector<8x16xf32>
    %cst_61 = arith.constant dense<0.000000e+00> : vector<8x256xf32>
    %88 = tpu.matmul %87, %83, %cst_61 {dimension_numbers = #tpu.dot_dimension_numbers<[1], [0], [0], [1], [0, 0, 1, 1], [], []>} : vector<8x16xf32>, vector<16x256xf32>, vector<8x256xf32> -> vector<8x256xf32>
    %89 = vector.extract_strided_slice %86 {offsets = [0, 16], sizes = [8, 16], strides = [1, 1]} : vector<8x32xf32> to vector<8x16xf32>
    %cst_62 = arith.constant dense<0.000000e+00> : vector<8x256xf32>
    %90 = tpu.matmul %89, %85, %cst_62 {dimension_numbers = #tpu.dot_dimension_numbers<[1], [0], [0], [1], [0, 0, 1, 1], [], []>} : vector<8x16xf32>, vector<16x256xf32>, vector<8x256xf32> -> vector<8x256xf32>
    %91 = arith.addf %88, %90 : vector<8x256xf32>
    %92 = vector.extract_strided_slice %4 {offsets = [0, 2], sizes = [8, 1], strides = [1, 1]} : vector<16x4xf32> to vector<8x1xf32>
    %93 = vector.broadcast %92 : vector<8x1xf32> to vector<8x256xf32>
    %94 = arith.addf %91, %93 : vector<8x256xf32>
    %c0_63 = arith.constant 0 : index
    %c128_64 = arith.constant 128 : index
    %95 = vector.load %arg12[%c0_63, %c128_64] : memref<16x512xf32, #tpu.memory_space<vmem>>, vector<8x256xf32>
    tpu.vector_store %arg12[%c0_63, %c128_64], %94 {strides = array<i32>} : memref<16x512xf32, #tpu.memory_space<vmem>>, vector<8x256xf32>,
    %c4_65 = arith.constant 4 : index
    %c0_66 = arith.constant 0 : index
    %c0_67 = arith.constant 0 : index
    %96 = vector.load %arg5[%c4_65, %c0_66, %c0_67] : memref<9x8x256xf32, #tpu.memory_space<vmem>>, vector<1x8x256xf32>
    %97 = vector.shape_cast %96 : vector<1x8x256xf32> to vector<8x256xf32>
    %98 = arith.mulf %94, %97 : vector<8x256xf32>
    %c0_68 = arith.constant 0 : index
    %c111_69 = arith.constant 111 : index
    %99 = vector.load %arg12[%c0_68, %c111_69] : memref<16x512xf32, #tpu.memory_space<vmem>>, vector<8x256xf32>
    %c0_70 = arith.constant 0 : index
    %c0_71 = arith.constant 0 : index
    %c0_72 = arith.constant 0 : index
    %100 = vector.load %arg5[%c0_70, %c0_71, %c0_72] : memref<9x8x256xf32, #tpu.memory_space<vmem>>, vector<1x8x256xf32>
    %101 = vector.shape_cast %100 : vector<1x8x256xf32> to vector<8x256xf32>
    %102 = arith.mulf %99, %101 : vector<8x256xf32>
    %103 = arith.addf %98, %102 : vector<8x256xf32>
    %c0_73 = arith.constant 0 : index
    %c112_74 = arith.constant 112 : index
    %104 = vector.load %arg12[%c0_73, %c112_74] : memref<16x512xf32, #tpu.memory_space<vmem>>, vector<8x256xf32>
    %c1_75 = arith.constant 1 : index
    %c0_76 = arith.constant 0 : index
    %c0_77 = arith.constant 0 : index
    %105 = vector.load %arg5[%c1_75, %c0_76, %c0_77] : memref<9x8x256xf32, #tpu.memory_space<vmem>>, vector<1x8x256xf32>
    %106 = vector.shape_cast %105 : vector<1x8x256xf32> to vector<8x256xf32>
    %107 = arith.mulf %104, %106 : vector<8x256xf32>
    %108 = arith.addf %103, %107 : vector<8x256xf32>
    %c0_78 = arith.constant 0 : index
    %c113_79 = arith.constant 113 : index
    %109 = vector.load %arg12[%c0_78, %c113_79] : memref<16x512xf32, #tpu.memory_space<vmem>>, vector<8x256xf32>
    %c2_80 = arith.constant 2 : index
    %c0_81 = arith.constant 0 : index
    %c0_82 = arith.constant 0 : index
    %110 = vector.load %arg5[%c2_80, %c0_81, %c0_82] : memref<9x8x256xf32, #tpu.memory_space<vmem>>, vector<1x8x256xf32>
    %111 = vector.shape_cast %110 : vector<1x8x256xf32> to vector<8x256xf32>
    %112 = arith.mulf %109, %111 : vector<8x256xf32>
    %113 = arith.addf %108, %112 : vector<8x256xf32>
    %c0_83 = arith.constant 0 : index
    %c127_84 = arith.constant 127 : index
    %114 = vector.load %arg12[%c0_83, %c127_84] : memref<16x512xf32, #tpu.memory_space<vmem>>, vector<8x256xf32>
    %c3_85 = arith.constant 3 : index
    %c0_86 = arith.constant 0 : index
    %c0_87 = arith.constant 0 : index
    %115 = vector.load %arg5[%c3_85, %c0_86, %c0_87] : memref<9x8x256xf32, #tpu.memory_space<vmem>>, vector<1x8x256xf32>
    %116 = vector.shape_cast %115 : vector<1x8x256xf32> to vector<8x256xf32>
    %117 = arith.mulf %114, %116 : vector<8x256xf32>
    %118 = arith.addf %113, %117 : vector<8x256xf32>
    %c0_88 = arith.constant 0 : index
    %c129_89 = arith.constant 129 : index
    %119 = vector.load %arg12[%c0_88, %c129_89] : memref<16x512xf32, #tpu.memory_space<vmem>>, vector<8x256xf32>
    %c5_90 = arith.constant 5 : index
    %c0_91 = arith.constant 0 : index
    %c0_92 = arith.constant 0 : index
    %120 = vector.load %arg5[%c5_90, %c0_91, %c0_92] : memref<9x8x256xf32, #tpu.memory_space<vmem>>, vector<1x8x256xf32>
    %121 = vector.shape_cast %120 : vector<1x8x256xf32> to vector<8x256xf32>
    %122 = arith.mulf %119, %121 : vector<8x256xf32>
    %123 = arith.addf %118, %122 : vector<8x256xf32>
    %c0_93 = arith.constant 0 : index
    %c143_94 = arith.constant 143 : index
    %124 = vector.load %arg12[%c0_93, %c143_94] : memref<16x512xf32, #tpu.memory_space<vmem>>, vector<8x256xf32>
    %c6_95 = arith.constant 6 : index
    %c0_96 = arith.constant 0 : index
    %c0_97 = arith.constant 0 : index
    %125 = vector.load %arg5[%c6_95, %c0_96, %c0_97] : memref<9x8x256xf32, #tpu.memory_space<vmem>>, vector<1x8x256xf32>
    %126 = vector.shape_cast %125 : vector<1x8x256xf32> to vector<8x256xf32>
    %127 = arith.mulf %124, %126 : vector<8x256xf32>
    %128 = arith.addf %123, %127 : vector<8x256xf32>
    %c0_98 = arith.constant 0 : index
    %c144_99 = arith.constant 144 : index
    %129 = vector.load %arg12[%c0_98, %c144_99] : memref<16x512xf32, #tpu.memory_space<vmem>>, vector<8x256xf32>
    %c7_100 = arith.constant 7 : index
    %c0_101 = arith.constant 0 : index
    %c0_102 = arith.constant 0 : index
    %130 = vector.load %arg5[%c7_100, %c0_101, %c0_102] : memref<9x8x256xf32, #tpu.memory_space<vmem>>, vector<1x8x256xf32>
    %131 = vector.shape_cast %130 : vector<1x8x256xf32> to vector<8x256xf32>
    %132 = arith.mulf %129, %131 : vector<8x256xf32>
    %133 = arith.addf %128, %132 : vector<8x256xf32>
    %c0_103 = arith.constant 0 : index
    %c145_104 = arith.constant 145 : index
    %134 = vector.load %arg12[%c0_103, %c145_104] : memref<16x512xf32, #tpu.memory_space<vmem>>, vector<8x256xf32>
    %c8_105 = arith.constant 8 : index
    %c0_106 = arith.constant 0 : index
    %c0_107 = arith.constant 0 : index
    %135 = vector.load %arg5[%c8_105, %c0_106, %c0_107] : memref<9x8x256xf32, #tpu.memory_space<vmem>>, vector<1x8x256xf32>
    %136 = vector.shape_cast %135 : vector<1x8x256xf32> to vector<8x256xf32>
    %137 = arith.mulf %134, %136 : vector<8x256xf32>
    %138 = arith.addf %133, %137 : vector<8x256xf32>
    %139 = vector.extract_strided_slice %4 {offsets = [0, 3], sizes = [8, 1], strides = [1, 1]} : vector<16x4xf32> to vector<8x1xf32>
    %140 = vector.broadcast %139 : vector<8x1xf32> to vector<8x256xf32>
    %141 = arith.addf %138, %140 : vector<8x256xf32>
    %142 = vector.extract_strided_slice %0 {offsets = [0, 0], sizes = [8, 256], strides = [1, 1]} : vector<16x256xf32> to vector<8x256xf32>
    %143 = arith.addf %94, %142 : vector<8x256xf32>
    %c0_108 = arith.constant 0 : index
    %c0_109 = arith.constant 0 : index
    %144 = vector.load %arg11[%c0_108, %c0_109] : memref<16x256xf32, #tpu.memory_space<vmem>>, vector<8x256xf32>
    tpu.vector_store %arg11[%c0_108, %c0_109], %143 {strides = array<i32>} : memref<16x256xf32, #tpu.memory_space<vmem>>, vector<8x256xf32>,
    %145 = vector.extract_strided_slice %0 {offsets = [8, 0], sizes = [8, 256], strides = [1, 1]} : vector<16x256xf32> to vector<8x256xf32>
    %146 = arith.addf %141, %145 : vector<8x256xf32>
    %c8_110 = arith.constant 8 : index
    %c0_111 = arith.constant 0 : index
    %147 = vector.load %arg11[%c8_110, %c0_111] : memref<16x256xf32, #tpu.memory_space<vmem>>, vector<8x256xf32>
    tpu.vector_store %arg11[%c8_110, %c0_111], %146 {strides = array<i32>} : memref<16x256xf32, #tpu.memory_space<vmem>>, vector<8x256xf32>,
    return
  }
  func.func @transform_0(%arg0: i32) -> (i32, i32) {
    %c0_i32 = arith.constant 0 : i32
    %c0_i32_0 = arith.constant 0 : i32
    return %c0_i32, %arg0 : i32, i32
  }
  func.func @transform_1(%arg0: i32) -> (i32, i32) {
    %c0_i32 = arith.constant 0 : i32
    %c0_i32_0 = arith.constant 0 : i32
    %c0_i32_1 = arith.constant 0 : i32
    return %c0_i32, %c0_i32_0 : i32, i32
  }
  func.func @transform_2(%arg0: i32) -> (i32, i32, i32) {
    %c0_i32 = arith.constant 0 : i32
    %c0_i32_0 = arith.constant 0 : i32
    %c0_i32_1 = arith.constant 0 : i32
    %c0_i32_2 = arith.constant 0 : i32
    return %c0_i32, %c0_i32_0, %c0_i32_1 : i32, i32, i32
  }
  func.func @transform_3(%arg0: i32) -> (i32, i32) {
    %c0_i32 = arith.constant 0 : i32
    %c0_i32_0 = arith.constant 0 : i32
    %c0_i32_1 = arith.constant 0 : i32
    return %c0_i32, %c0_i32_0 : i32, i32
  }
  func.func @transform_4(%arg0: i32) -> (i32, i32, i32) {
    %c0_i32 = arith.constant 0 : i32
    %c0_i32_0 = arith.constant 0 : i32
    %c0_i32_1 = arith.constant 0 : i32
    %c0_i32_2 = arith.constant 0 : i32
    return %c0_i32, %c0_i32_0, %c0_i32_1 : i32, i32, i32
  }
  func.func @transform_5(%arg0: i32) -> (i32, i32) {
    %c0_i32 = arith.constant 0 : i32
    %c0_i32_0 = arith.constant 0 : i32
    %c0_i32_1 = arith.constant 0 : i32
    return %c0_i32, %c0_i32_0 : i32, i32
  }
  func.func @transform_6(%arg0: i32) -> (i32, i32) {
    %c0_i32 = arith.constant 0 : i32
    %c0_i32_0 = arith.constant 0 : i32
    %c0_i32_1 = arith.constant 0 : i32
    return %c0_i32, %c0_i32_0 : i32, i32
  }
  func.func @transform_7(%arg0: i32) -> (i32, i32) {
    %c0_i32 = arith.constant 0 : i32
    %c0_i32_0 = arith.constant 0 : i32
    %c0_i32_1 = arith.constant 0 : i32
    return %c0_i32, %c0_i32_0 : i32, i32
  }
  func.func @transform_8(%arg0: i32) -> (i32, i32) {
    %c0_i32 = arith.constant 0 : i32
    %c0_i32_0 = arith.constant 0 : i32
    %c0_i32_1 = arith.constant 0 : i32
    return %c0_i32, %c0_i32_0 : i32, i32
  }
  func.func @transform_9(%arg0: i32) -> (i32, i32) {
    %c0_i32 = arith.constant 0 : i32
    %c0_i32_0 = arith.constant 0 : i32
    %c0_i32_1 = arith.constant 0 : i32
    return %c0_i32, %c0_i32_0 : i32, i32
  }
  func.func @transform_10(%arg0: i32) -> (i32, i32) {
    %c0_i32 = arith.constant 0 : i32
    %c0_i32_0 = arith.constant 0 : i32
    return %c0_i32, %arg0 : i32, i32
  }
}

</mosaic_0001>

<llo_original>
// kernel: tpu_custom_call.1
$region0: #{tpu_custom_call.1}
  #allocation0 [shape = 'u32[]', space=smem, size = 0x4, offset = 0x4, fixed_abs, tag = 'smem constant byte address 0x4 - core index']
  #allocation1 [shape = 'u32[144,128]{1,0:T(1,128)}', space=vmem, size = 0x12000, scoped, tag = 'internal scratch']
  #allocation2 [shape = 'f32[16,512]{1,0:T(8,128)}', space=vmem, size = 0x8000, scoped, tag = 'scratch operand']
  %s0 = inlined_call_operand.hbm [shape: f32[16,512], index: 0, kind: input, shape index: {}]
  %s1 = inlined_call_operand.vmem [shape: f32[16,16], index: 1, kind: input, shape index: {}]
  %s2 = inlined_call_operand.hbm [shape: f32[9,16,256], index: 2, kind: input, shape index: {}]
  %s3 = inlined_call_operand.vmem [shape: f32[8,32], index: 3, kind: input, shape index: {}]
  %s4 = inlined_call_operand.hbm [shape: f32[9,8,256], index: 4, kind: input, shape index: {}]
  %s5 = inlined_call_operand.vmem [shape: f32[8,32], index: 5, kind: input, shape index: {}]
  %s6 = inlined_call_operand.vmem [shape: f32[32,8], index: 6, kind: input, shape index: {}]
  %s7 = inlined_call_operand.hbm [shape: f32[256,128], index: 7, kind: input, shape index: {}]
  %s8 = inlined_call_operand.hbm [shape: f32[128,256], index: 8, kind: input, shape index: {}]
  %s9 = inlined_call_operand.vmem [shape: f32[16,4], index: 9, kind: input, shape index: {}]
  %s10 = inlined_call_operand.hbm [shape: f32[16,512], index: 10, kind: output, shape index: {}]
  %s11 = sld [smem:[#allocation0]]
  $region93: #{tpu_custom_call.1} parent=0
    _
  %s13 = ssub.s32 1, %s11
  %s14 = scalar_select 0, %s13, %s11
  $region1: #{tpu_custom_call.1} parent=0
    #allocation3 [shape = 'u8[32768]{0}', space=vmem, size = 0x8000, scoped, tag = 'input window, operand 0']
    #allocation4 [shape = 's32[2]{0}', space=sflag, size = 0x8, scoped, tag = 'scoped memory for tpu_custom_call.1']
    #allocation5 [shape = 's32[2]{0}', space=sflag, size = 0x8, scoped, tag = 'scoped memory for tpu_custom_call.1']
    #allocation6 [shape = 'u8[147456]{0}', space=vmem, size = 0x24000, scoped, tag = 'input window, operand 2, single buffered']
    #allocation7 [shape = 's32[1]{0}', space=sflag, size = 0x4, scoped, tag = 'scoped memory for tpu_custom_call.1']
    #allocation8 [shape = 'u8[73728]{0}', space=vmem, size = 0x12000, scoped, tag = 'input window, operand 4, single buffered']
    #allocation9 [shape = 'u8[131072]{0}', space=vmem, size = 0x20000, scoped, tag = 'input window, operand 7, single buffered']
    #allocation10 [shape = 's32[1]{0}', space=sflag, size = 0x4, scoped, tag = 'scoped memory for tpu_custom_call.1']
    #allocation11 [shape = 'u8[131072]{0}', space=vmem, size = 0x20000, scoped, tag = 'input window, operand 8, single buffered']
    #allocation12 [shape = 'u8[32768]{0}', space=vmem, size = 0x8000, scoped, tag = 'output window, operand 0']
    %15 = vsyncpa [#allocation4], 0
    %s16 = scalar_lea.sflag [#allocation4], 1
    %17 = vsyncpa %s16, 0
    %18 = vsyncpa [#allocation7], 0
    %19 = vsyncpa [#allocation10], 0
    %20 = vsyncpa [#allocation5], 0
    %s21 = scalar_lea.sflag [#allocation5], 1
    %22 = vsyncpa %s21, 0
    loop: start=0, step=1, limit=4
    $region2: #{tpu_custom_call.1} parent=1 // loop_pre_header
      _
    $region3: #{tpu_custom_call.1} parent=1 // loop_header
      %s24 = sphi 0, %s28
      %p25 = scmp.ge.s32.totalorder %s24, 4
      %s34 = sphi 0, %s36
      %s37 = sphi 0, %s34
      %s38 = sphi 0, %s37
      %s54 = sphi 0, %s38
      %s58 = sphi 0, %s58
      %s60 = sphi 0, %s58
      %s61 = sphi 0, %s60
      %s75 = sphi 0, %s61
      %s79 = sphi 0, %s79
      %s81 = sphi 0, %s79
      %s82 = sphi 0, %s81
      %s96 = sphi 0, %s82
      %s100 = sphi 0, %s100
      %s102 = sphi 0, %s100
      %s103 = sphi 0, %s102
      %s117 = sphi 0, %s103
      %s121 = sphi 0, %s121
      %s123 = sphi 0, %s121
      %s124 = sphi 0, %s123
      %s138 = sphi 0, %s124
      %s142 = sphi 0, %s142
      %s144 = sphi 0, %s142
      %s145 = sphi 0, %s144
      %s159 = sphi 0, %s145
      %s163 = sphi 0, %s163
      %s165 = sphi 0, %s163
      %s166 = sphi 0, %s165
      %s180 = sphi 0, %s166
      %s184 = sphi 0, %s184
      %s186 = sphi 0, %s184
      %s187 = sphi 0, %s186
      %s201 = sphi 0, %s187
      %s205 = sphi 0, %s205
      %s207 = sphi 0, %s205
      %s208 = sphi 0, %s207
      %s222 = sphi 0, %s208
      %s226 = sphi 0, %s226
      %s228 = sphi 0, %s226
      %s229 = sphi 0, %s228
      %s243 = sphi 0, %s229
      %s249 = sphi 0, %s251
      %s252 = sphi 0, %s249
      %s253 = sphi 0, %s252
      %s269 = sphi 0, %s253
    $region4: #{tpu_custom_call.1} parent=1 // loop_header_branch
      %27 = sbr.rel (%p25) target = $region8
    $region5: #{tpu_custom_call.1} parent=1 // loop_body
      %s29 = ssub.s32 %s24, 1
      %s30 = ssub.s32 %s24, 2
      %s31 = sadd.s32 %s24, 1
      %s32 = ssub.s32 %s24, %s31
      %p33 = scmp.eq.s32.totalorder %s32, 0
      %s35 = sadd.s32 %s34, 1
      %s36 = scalar_select %p33, %s34, %s35
      %p39 = pneg %p33
      %p40 = scmp.eq.s32.totalorder %s24, 1
      %p41 = por %p39, %p40
      %p42 = scmp.ne.s32.totalorder %s34, %s37
      %p43 = scmp.eq.s32.totalorder %s24, 0
      %p44 = por %p42, %p43
      %p45 = scmp.ne.s32.totalorder %s34, %s37
      %p46 = scmp.eq.s32.totalorder %s29, 1
      %p47 = por %p45, %p46
      %p48 = scmp.ne.s32.totalorder %s37, %s38
      %p49 = scmp.eq.s32.totalorder %s29, 0
      %p50 = por %p48, %p49
      %p51 = scmp.ne.s32.totalorder %s37, %s38
      %p52 = scmp.eq.s32.totalorder %s30, 1
      %p53 = por %p51, %p52
      %p55 = scmp.ne.s32.totalorder %s38, %s54
      %p56 = scmp.eq.s32.totalorder %s30, 0
      %p57 = por %p55, %p56
      %s59 = sadd.s32 %s58, 1
      %p62 = scmp.eq.s32.totalorder %s24, 1
      %p63 = scmp.ne.s32.totalorder %s58, %s60
      %p64 = scmp.eq.s32.totalorder %s24, 0
      %p65 = por %p63, %p64
      %p66 = scmp.ne.s32.totalorder %s58, %s60
      %p67 = scmp.eq.s32.totalorder %s29, 1
      %p68 = por %p66, %p67
      %p69 = scmp.ne.s32.totalorder %s60, %s61
      %p70 = scmp.eq.s32.totalorder %s29, 0
      %p71 = por %p69, %p70
      %p72 = scmp.ne.s32.totalorder %s60, %s61
      %p73 = scmp.eq.s32.totalorder %s30, 1
      %p74 = por %p72, %p73
      %p76 = scmp.ne.s32.totalorder %s61, %s75
      %p77 = scmp.eq.s32.totalorder %s30, 0
      %p78 = por %p76, %p77
      %s80 = sadd.s32 %s79, 1
      %p83 = scmp.eq.s32.totalorder %s24, 1
      %p84 = scmp.ne.s32.totalorder %s79, %s81
      %p85 = scmp.eq.s32.totalorder %s24, 0
      %p86 = por %p84, %p85
      %p87 = scmp.ne.s32.totalorder %s79, %s81
      %p88 = scmp.eq.s32.totalorder %s29, 1
      %p89 = por %p87, %p88
      %p90 = scmp.ne.s32.totalorder %s81, %s82
      %p91 = scmp.eq.s32.totalorder %s29, 0
      %p92 = por %p90, %p91
      %p93 = scmp.ne.s32.totalorder %s81, %s82
      %p94 = scmp.eq.s32.totalorder %s30, 1
      %p95 = por %p93, %p94
      %p97 = scmp.ne.s32.totalorder %s82, %s96
      %p98 = scmp.eq.s32.totalorder %s30, 0
      %p99 = por %p97, %p98
      %s101 = sadd.s32 %s100, 1
      %p104 = scmp.eq.s32.totalorder %s24, 1
      %p105 = scmp.ne.s32.totalorder %s100, %s102
      %p106 = scmp.eq.s32.totalorder %s24, 0
      %p107 = por %p105, %p106
      %p108 = scmp.ne.s32.totalorder %s100, %s102
      %p109 = scmp.eq.s32.totalorder %s29, 1
      %p110 = por %p108, %p109
      %p111 = scmp.ne.s32.totalorder %s102, %s103
      %p112 = scmp.eq.s32.totalorder %s29, 0
      %p113 = por %p111, %p112
      %p114 = scmp.ne.s32.totalorder %s102, %s103
      %p115 = scmp.eq.s32.totalorder %s30, 1
      %p116 = por %p114, %p115
      %p118 = scmp.ne.s32.totalorder %s103, %s117
      %p119 = scmp.eq.s32.totalorder %s30, 0
      %p120 = por %p118, %p119
      %s122 = sadd.s32 %s121, 1
      %p125 = scmp.eq.s32.totalorder %s24, 1
      %p126 = scmp.ne.s32.totalorder %s121, %s123
      %p127 = scmp.eq.s32.totalorder %s24, 0
      %p128 = por %p126, %p127
      %p129 = scmp.ne.s32.totalorder %s121, %s123
      %p130 = scmp.eq.s32.totalorder %s29, 1
      %p131 = por %p129, %p130
      %p132 = scmp.ne.s32.totalorder %s123, %s124
      %p133 = scmp.eq.s32.totalorder %s29, 0
      %p134 = por %p132, %p133
      %p135 = scmp.ne.s32.totalorder %s123, %s124
      %p136 = scmp.eq.s32.totalorder %s30, 1
      %p137 = por %p135, %p136
      %p139 = scmp.ne.s32.totalorder %s124, %s138
      %p140 = scmp.eq.s32.totalorder %s30, 0
      %p141 = por %p139, %p140
      %s143 = sadd.s32 %s142, 1
      %p146 = scmp.eq.s32.totalorder %s24, 1
      %p147 = scmp.ne.s32.totalorder %s142, %s144
      %p148 = scmp.eq.s32.totalorder %s24, 0
      %p149 = por %p147, %p148
      %p150 = scmp.ne.s32.totalorder %s142, %s144
      %p151 = scmp.eq.s32.totalorder %s29, 1
      %p152 = por %p150, %p151
      %p153 = scmp.ne.s32.totalorder %s144, %s145
      %p154 = scmp.eq.s32.totalorder %s29, 0
      %p155 = por %p153, %p154
      %p156 = scmp.ne.s32.totalorder %s144, %s145
      %p157 = scmp.eq.s32.totalorder %s30, 1
      %p158 = por %p156, %p157
      %p160 = scmp.ne.s32.totalorder %s145, %s159
      %p161 = scmp.eq.s32.totalorder %s30, 0
      %p162 = por %p160, %p161
      %s164 = sadd.s32 %s163, 1
      %p167 = scmp.eq.s32.totalorder %s24, 1
      %p168 = scmp.ne.s32.totalorder %s163, %s165
      %p169 = scmp.eq.s32.totalorder %s24, 0
      %p170 = por %p168, %p169
      %p171 = scmp.ne.s32.totalorder %s163, %s165
      %p172 = scmp.eq.s32.totalorder %s29, 1
      %p173 = por %p171, %p172
      %p174 = scmp.ne.s32.totalorder %s165, %s166
      %p175 = scmp.eq.s32.totalorder %s29, 0
      %p176 = por %p174, %p175
      %p177 = scmp.ne.s32.totalorder %s165, %s166
      %p178 = scmp.eq.s32.totalorder %s30, 1
      %p179 = por %p177, %p178
      %p181 = scmp.ne.s32.totalorder %s166, %s180
      %p182 = scmp.eq.s32.totalorder %s30, 0
      %p183 = por %p181, %p182
      %s185 = sadd.s32 %s184, 1
      %p188 = scmp.eq.s32.totalorder %s24, 1
      %p189 = scmp.ne.s32.totalorder %s184, %s186
      %p190 = scmp.eq.s32.totalorder %s24, 0
      %p191 = por %p189, %p190
      %p192 = scmp.ne.s32.totalorder %s184, %s186
      %p193 = scmp.eq.s32.totalorder %s29, 1
      %p194 = por %p192, %p193
      %p195 = scmp.ne.s32.totalorder %s186, %s187
      %p196 = scmp.eq.s32.totalorder %s29, 0
      %p197 = por %p195, %p196
      %p198 = scmp.ne.s32.totalorder %s186, %s187
      %p199 = scmp.eq.s32.totalorder %s30, 1
      %p200 = por %p198, %p199
      %p202 = scmp.ne.s32.totalorder %s187, %s201
      %p203 = scmp.eq.s32.totalorder %s30, 0
      %p204 = por %p202, %p203
      %s206 = sadd.s32 %s205, 1
      %p209 = scmp.eq.s32.totalorder %s24, 1
      %p210 = scmp.ne.s32.totalorder %s205, %s207
      %p211 = scmp.eq.s32.totalorder %s24, 0
      %p212 = por %p210, %p211
      %p213 = scmp.ne.s32.totalorder %s205, %s207
      %p214 = scmp.eq.s32.totalorder %s29, 1
      %p215 = por %p213, %p214
      %p216 = scmp.ne.s32.totalorder %s207, %s208
      %p217 = scmp.eq.s32.totalorder %s29, 0
      %p218 = por %p216, %p217
      %p219 = scmp.ne.s32.totalorder %s207, %s208
      %p220 = scmp.eq.s32.totalorder %s30, 1
      %p221 = por %p219, %p220
      %p223 = scmp.ne.s32.totalorder %s208, %s222
      %p224 = scmp.eq.s32.totalorder %s30, 0
      %p225 = por %p223, %p224
      %s227 = sadd.s32 %s226, 1
      %p230 = scmp.eq.s32.totalorder %s24, 1
      %p231 = scmp.ne.s32.totalorder %s226, %s228
      %p232 = scmp.eq.s32.totalorder %s24, 0
      %p233 = por %p231, %p232
      %p234 = scmp.ne.s32.totalorder %s226, %s228
      %p235 = scmp.eq.s32.totalorder %s29, 1
      %p236 = por %p234, %p235
      %p237 = scmp.ne.s32.totalorder %s228, %s229
      %p238 = scmp.eq.s32.totalorder %s29, 0
      %p239 = por %p237, %p238
      %p240 = scmp.ne.s32.totalorder %s228, %s229
      %p241 = scmp.eq.s32.totalorder %s30, 1
      %p242 = por %p240, %p241
      %p244 = scmp.ne.s32.totalorder %s229, %s243
      %p245 = scmp.eq.s32.totalorder %s30, 0
      %p246 = por %p244, %p245
      %s247 = ssub.s32 %s24, %s31
      %p248 = scmp.eq.s32.totalorder %s247, 0
      %s250 = sadd.s32 %s249, 1
      %s251 = scalar_select %p248, %s249, %s250
      %p254 = pneg %p248
      %p255 = scmp.eq.s32.totalorder %s24, 1
      %p256 = por %p254, %p255
      %p257 = scmp.ne.s32.totalorder %s249, %s252
      %p258 = scmp.eq.s32.totalorder %s24, 0
      %p259 = por %p257, %p258
      %p260 = scmp.ne.s32.totalorder %s249, %s252
      %p261 = scmp.eq.s32.totalorder %s29, 1
      %p262 = por %p260, %p261
      %p263 = scmp.ne.s32.totalorder %s252, %s253
      %p264 = scmp.eq.s32.totalorder %s29, 0
      %p265 = por %p263, %p264
      %p266 = scmp.ne.s32.totalorder %s252, %s253
      %p267 = scmp.eq.s32.totalorder %s30, 1
      %p268 = por %p266, %p267
      %p270 = scmp.ne.s32.totalorder %s253, %s269
      %p271 = scmp.eq.s32.totalorder %s30, 0
      %p272 = por %p270, %p271
      %p273 = scmp.le.s32.totalorder 1, %s24
      %p274 = scmp.lt.s32.totalorder %s24, 3
      %p275 = pnand %p273, %p274
      %p276 = pneg %p275
      // Predicated region
      $region9: #{tpu_custom_call.1} parent=5 // pred_check
        _
      $region10: #{tpu_custom_call.1} parent=5 // pred_check_branch
        %278 = sbr.rel (%p275) target = $region12
      $region11: #{tpu_custom_call.1} parent=5 // pred_region
        %s279 = ssub.s32 %s24, 1
        // Predicated region
        $region13: #{tpu_custom_call.1} parent=11 // pred_check
          %p280 = pneg %p71
        $region14: #{tpu_custom_call.1} parent=11 // pred_check_branch
          %282 = sbr.rel (%p280) target = $region16
        $region15: #{tpu_custom_call.1} parent=11 // pred_region
          _
        $region16: #{tpu_custom_call.1} parent=11 // pred_fallthru
          _
        // Predicated region
        $region17: #{tpu_custom_call.1} parent=11 // pred_check
          %p283 = pneg %p92
        $region18: #{tpu_custom_call.1} parent=11 // pred_check_branch
          %285 = sbr.rel (%p283) target = $region20
        $region19: #{tpu_custom_call.1} parent=11 // pred_region
          %s287 = ssub.s32 4608, 4608
          %288 = vsyncadd [#allocation7], %s287
          %s289 = sshll.u32 [#allocation6], 4
          %s290 = int_to_ptr.vmem [resolvable:$true] %s289
          %295 = dma.hbm_to_vmem [thread:$0]  %s2, 4608, %s290, [#allocation7], 256, 256, 16
        $region20: #{tpu_custom_call.1} parent=11 // pred_fallthru
          _
        // Predicated region
        $region21: #{tpu_custom_call.1} parent=11 // pred_check
          %p296 = pneg %p113
        $region22: #{tpu_custom_call.1} parent=11 // pred_check_branch
          %298 = sbr.rel (%p296) target = $region24
        $region23: #{tpu_custom_call.1} parent=11 // pred_region
          _
        $region24: #{tpu_custom_call.1} parent=11 // pred_fallthru
          _
        // Predicated region
        $region25: #{tpu_custom_call.1} parent=11 // pred_check
          %p299 = pneg %p134
        $region26: #{tpu_custom_call.1} parent=11 // pred_check_branch
          %301 = sbr.rel (%p299) target = $region28
        $region27: #{tpu_custom_call.1} parent=11 // pred_region
          %s303 = ssub.s32 2304, 2304
          %304 = vsyncadd [#allocation7], %s303
          %s305 = sshll.u32 [#allocation8], 4
          %s306 = int_to_ptr.vmem [resolvable:$true] %s305
          %311 = dma.hbm_to_vmem [thread:$0]  %s4, 2304, %s306, [#allocation7], 256, 256, 16
        $region28: #{tpu_custom_call.1} parent=11 // pred_fallthru
          _
        // Predicated region
        $region29: #{tpu_custom_call.1} parent=11 // pred_check
          %p312 = pneg %p155
        $region30: #{tpu_custom_call.1} parent=11 // pred_check_branch
          %314 = sbr.rel (%p312) target = $region32
        $region31: #{tpu_custom_call.1} parent=11 // pred_region
          _
        $region32: #{tpu_custom_call.1} parent=11 // pred_fallthru
          _
        // Predicated region
        $region33: #{tpu_custom_call.1} parent=11 // pred_check
          %p315 = pneg %p176
        $region34: #{tpu_custom_call.1} parent=11 // pred_check_branch
          %317 = sbr.rel (%p315) target = $region36
        $region35: #{tpu_custom_call.1} parent=11 // pred_region
          _
        $region36: #{tpu_custom_call.1} parent=11 // pred_fallthru
          _
        // Predicated region
        $region37: #{tpu_custom_call.1} parent=11 // pred_check
          %p318 = pneg %p197
        $region38: #{tpu_custom_call.1} parent=11 // pred_check_branch
          %320 = sbr.rel (%p318) target = $region40
        $region39: #{tpu_custom_call.1} parent=11 // pred_region
          %s322 = ssub.s32 4096, 4096
          %323 = vsyncadd [#allocation10], %s322
          %s324 = sshll.u32 [#allocation9], 4
          %s325 = int_to_ptr.vmem [resolvable:$true] %s324
          %330 = dma.hbm_to_vmem [thread:$0]  %s7, 4096, %s325, [#allocation10], 128, 128, 8
        $region40: #{tpu_custom_call.1} parent=11 // pred_fallthru
          _
        // Predicated region
        $region41: #{tpu_custom_call.1} parent=11 // pred_check
          %p331 = pneg %p218
        $region42: #{tpu_custom_call.1} parent=11 // pred_check_branch
          %333 = sbr.rel (%p331) target = $region44
        $region43: #{tpu_custom_call.1} parent=11 // pred_region
          %s335 = ssub.s32 4096, 4096
          %336 = vsyncadd [#allocation10], %s335
          %s337 = sshll.u32 [#allocation11], 4
          %s338 = int_to_ptr.vmem [resolvable:$true] %s337
          %343 = dma.hbm_to_vmem [thread:$0]  %s8, 4096, %s338, [#allocation10], 256, 256, 16
        $region44: #{tpu_custom_call.1} parent=11 // pred_fallthru
          _
        // Predicated region
        $region45: #{tpu_custom_call.1} parent=11 // pred_check
          %p344 = pneg %p239
        $region46: #{tpu_custom_call.1} parent=11 // pred_check_branch
          %346 = sbr.rel (%p344) target = $region48
        $region47: #{tpu_custom_call.1} parent=11 // pred_region
          _
        $region48: #{tpu_custom_call.1} parent=11 // pred_fallthru
          _
      $region12: #{tpu_custom_call.1} parent=5 // pred_fallthru
        _
      %p347 = scmp.lt.s32.totalorder %s24, 2
      // Predicated region
      $region49: #{tpu_custom_call.1} parent=5 // pred_check
        %p348 = pneg %p347
      $region50: #{tpu_custom_call.1} parent=5 // pred_check_branch
        %350 = sbr.rel (%p348) target = $region52
      $region51: #{tpu_custom_call.1} parent=5 // pred_region
        // Predicated region
        $region53: #{tpu_custom_call.1} parent=51 // pred_check
          %p351 = pneg %p44
        $region54: #{tpu_custom_call.1} parent=51 // pred_check_branch
          %353 = sbr.rel (%p351) target = $region56
        $region55: #{tpu_custom_call.1} parent=51 // pred_region
          %s354 = sand.u32 %s34, 1
          %s355 = scalar_lea.sflag [#allocation4], %s354
          %s356 = sand.u32 %s34, 1
          %s357 = smul.addr %s356, 32
          %s358 = scalar_lea.vmem [#allocation3], %s357
          %s359 = smul.u32 2, %s24
          %s361 = ssub.s32 512, 512
          %362 = vsyncadd %s355, %s361
          %s363 = smul.addr %s359, 128
          %s364 = scalar_lea.hbm %s0, %s363
          %s365 = sshll.u32 %s358, 4
          %s366 = int_to_ptr.vmem [resolvable:$true] %s365
          %371 = dma.hbm_to_vmem [thread:$0]  %s364, 512, %s366, %s355, 512, 256, 16
        $region56: #{tpu_custom_call.1} parent=51 // pred_fallthru
          _
      $region52: #{tpu_custom_call.1} parent=5 // pred_fallthru
        _
      %p372 = scmp.le.s32.totalorder 1, %s24
      %p373 = scmp.lt.s32.totalorder %s24, 3
      %p374 = pnand %p372, %p373
      %p375 = pneg %p374
      // Predicated region
      $region57: #{tpu_custom_call.1} parent=5 // pred_check
        _
      $region58: #{tpu_custom_call.1} parent=5 // pred_check_branch
        %377 = sbr.rel (%p374) target = $region60
      $region59: #{tpu_custom_call.1} parent=5 // pred_region
        %s378 = ssub.s32 %s24, 1
        %s379 = sand.u32 %s37, 1
        %s380 = scalar_lea.sflag [#allocation4], %s379
        %s381 = sand.u32 %s37, 1
        %s382 = smul.addr %s381, 32
        %s383 = scalar_lea.vmem [#allocation3], %s382
        // Predicated region
        $region61: #{tpu_custom_call.1} parent=59 // pred_check
          %p384 = pneg %p50
        $region62: #{tpu_custom_call.1} parent=59 // pred_check_branch
          %386 = sbr.rel (%p384) target = $region64
        $region63: #{tpu_custom_call.1} parent=59 // pred_region
          %387 = dma.done %s380, 512
        $region64: #{tpu_custom_call.1} parent=59 // pred_fallthru
          _
        // Predicated region
        $region65: #{tpu_custom_call.1} parent=59 // pred_check
          %p388 = pneg %p92
        $region66: #{tpu_custom_call.1} parent=59 // pred_check_branch
          %390 = sbr.rel (%p388) target = $region68
        $region67: #{tpu_custom_call.1} parent=59 // pred_region
          %391 = dma.done [#allocation7], 4608
        $region68: #{tpu_custom_call.1} parent=59 // pred_fallthru
          _
        // Predicated region
        $region69: #{tpu_custom_call.1} parent=59 // pred_check
          %p392 = pneg %p134
        $region70: #{tpu_custom_call.1} parent=59 // pred_check_branch
          %394 = sbr.rel (%p392) target = $region72
        $region71: #{tpu_custom_call.1} parent=59 // pred_region
          %395 = dma.done [#allocation7], 2304
        $region72: #{tpu_custom_call.1} parent=59 // pred_fallthru
          _
        // Predicated region
        $region73: #{tpu_custom_call.1} parent=59 // pred_check
          %p396 = pneg %p197
        $region74: #{tpu_custom_call.1} parent=59 // pred_check_branch
          %398 = sbr.rel (%p396) target = $region76
        $region75: #{tpu_custom_call.1} parent=59 // pred_region
          %399 = dma.done [#allocation10], 4096
        $region76: #{tpu_custom_call.1} parent=59 // pred_fallthru
          _
        // Predicated region
        $region77: #{tpu_custom_call.1} parent=59 // pred_check
          %p400 = pneg %p218
        $region78: #{tpu_custom_call.1} parent=59 // pred_check_branch
          %402 = sbr.rel (%p400) target = $region80
        $region79: #{tpu_custom_call.1} parent=59 // pred_region
          %403 = dma.done [#allocation10], 4096
        $region80: #{tpu_custom_call.1} parent=59 // pred_fallthru
          _
        %s404 = sand.u32 %s37, 1
        %s405 = scalar_lea.sflag [#allocation4], %s404
        %s406 = sand.u32 %s37, 1
        %s407 = smul.addr %s406, 32
        %s408 = scalar_lea.vmem [#allocation3], %s407
        %p409 = pneg %p50
        %p410 = pneg %p47
        %p411 = pneg %p71
        %p412 = pneg %p68
        %p413 = pneg %p92
        %p414 = pneg %p89
        %p415 = pneg %p113
        %p416 = pneg %p110
        %p417 = pneg %p134
        %p418 = pneg %p131
        %p419 = pneg %p155
        %p420 = pneg %p152
        %p421 = pneg %p176
        %p422 = pneg %p173
        %p423 = pneg %p197
        %p424 = pneg %p194
        %p425 = pneg %p218
        %p426 = pneg %p215
        %p427 = pneg %p239
        %p428 = pneg %p236
        %p429 = pneg %p265
        %p430 = pneg %p262
        %s431 = sand.u32 %s252, 1
        %s432 = scalar_lea.sflag [#allocation5], %s431
        %s433 = sand.u32 %s252, 1
        %s434 = smul.addr %s433, 32
        %s435 = scalar_lea.vmem [#allocation12], %s434
        %s436 = smul.u32 2, %s29
        %s437 = smul.u32 2, %s29
        %v438 = vld [vmem:[%s383] sm:$0xff]
        %v439 = vld [vmem:[%s383 + $0x8] sm:$0xff]
        %v440 = vld [vmem:[%s383 + $0x10] sm:$0xff]
        %v441 = vld [vmem:[%s383 + $0x18] sm:$0xff]
        %442 = vst [vmem:[#allocation2] sm:$0xff] 0.0
        %443 = vst [vmem:[#allocation2 + $0x20] sm:$0xff] 0.0
        %444 = vst [vmem:[#allocation2 + $0x18] sm:$0xff] 0.0
        %445 = vst [vmem:[#allocation2 + $0x38] sm:$0xff] 0.0
        %v446 = vld [vmem:[%s9] sm:$0xff]
        %v447 = vld [vmem:[%s9 + $0x8] sm:$0xff]
        %v448 = vld [vmem:[%s1] sm:$0xff]
        %v449 = vld [vmem:[%s1 + $0x8] sm:$0xff]
        %451 = vset.pattern.permute.xlu0 0
        %452 = vperm.xlu0 %451, %v446
        %v453 = vpop.permute.xlu0 %452
        %456 = vset.pattern.permute.xlu0 0
        %457 = vperm.xlu0 %456, %v447
        %v458 = vpop.permute.xlu0 %457
        %vm460 = vcmask 130048
        %v462 = vsel %vm460, %v448, 0
        %v465 = vsel %vm460, %v449, 0
        %467 = vmatprep.subr.mxu0 0.0
        %468 = vmatpush1.msra.mxu0 0.0
        %469 = vmatprep.subr.mxu0 0.0
        %470 = vmatpush1.msra.mxu0 0.0
        %471 = vmatprep.subr.mxu0 0.0
        %472 = vmatpush1.msra.mxu0 0.0
        %473 = vmatprep.subr.mxu0 0.0
        %474 = vmatpush1.msra.mxu0 0.0
        %475 = vmatprep.subr.mxu0 0.0
        %476 = vmatpush1.msra.mxu0 0.0
        %477 = vmatprep.subr.mxu0 0.0
        %478 = vmatpush1.msra.mxu0 0.0
        %479 = vmatprep.subr.mxu0 0.0
        %480 = vmatpush1.msra.mxu0 0.0
        %481 = vmatprep.subr.mxu0 0.0
        %482 = vmatpush1.msra.mxu0 0.0
        %483 = vmatprep.subr.mxu0 0.0
        %484 = vmatpush1.msra.mxu0 0.0
        %485 = vmatprep.subr.mxu0 0.0
        %486 = vmatpush1.msra.mxu0 0.0
        %487 = vmatprep.subr.mxu0 0.0
        %488 = vmatpush1.msra.mxu0 0.0
        %489 = vmatprep.subr.mxu0 0.0
        %490 = vmatpush1.msra.mxu0 0.0
        %491 = vmatprep.subr.mxu0 0.0
        %492 = vmatpush1.msra.mxu0 0.0
        %493 = vmatprep.subr.mxu0 0.0
        %494 = vmatpush1.msra.mxu0 0.0
        %495 = vmatprep.subr.mxu0 %v441
        %496 = vmatpush1.msra.mxu0 %v440
        %497 = vmatprep.subr.mxu0 %v439
        %498 = vmatpush1.msra.mxu0 %v438
        %499 = vmatprep.subr.mxu0 0.0
        %500 = vmatpush2.msra.mxu0 0.0
        %501 = vmatprep.subr.mxu0 0.0
        %502 = vmatpush2.msra.mxu0 0.0
        %503 = vmatprep.subr.mxu0 0.0
        %504 = vmatpush2.msra.mxu0 0.0
        %505 = vmatprep.subr.mxu0 0.0
        %506 = vmatpush2.msra.mxu0 0.0
        %507 = vmatprep.subr.mxu0 0.0
        %508 = vmatpush2.msra.mxu0 0.0
        %509 = vmatprep.subr.mxu0 0.0
        %510 = vmatpush2.msra.mxu0 0.0
        %511 = vmatprep.subr.mxu0 0.0
        %512 = vmatpush2.msra.mxu0 0.0
        %513 = vmatprep.subr.mxu0 0.0
        %514 = vmatpush2.msra.mxu0 0.0
        %515 = vmatprep.subr.mxu0 0.0
        %516 = vmatpush2.msra.mxu0 0.0
        %517 = vmatprep.subr.mxu0 0.0
        %518 = vmatpush2.msra.mxu0 0.0
        %519 = vmatprep.subr.mxu0 0.0
        %520 = vmatpush2.msra.mxu0 0.0
        %521 = vmatprep.subr.mxu0 0.0
        %522 = vmatpush2.msra.mxu0 0.0
        %523 = vmatprep.subr.mxu0 0.0
        %524 = vmatpush2.msra.mxu0 0.0
        %525 = vmatprep.subr.mxu0 0.0
        %526 = vmatpush2.msra.mxu0 0.0
        %527 = vmatprep.subr.mxu0 0.0
        %528 = vmatpush2.msra.mxu0 0.0
        %529 = vmatprep.subr.mxu0 0.0
        %530 = vmatpush2.msra.mxu0 0.0
        %531 = vmatprep.mubr.f32.mxu0 0.0
        %532 = vmatmul.mubr.f32.gmra.mxu0 %v462
        %v533 = vpop.f32.mrf.mxu0
        %v534 = vadd.f32 %v453, %v533
        %v535 = vpop.f32.mrf.mxu0
        %v536 = vadd.f32 %v453, %v535
        %537 = vmatprep.mubr.f32.mxu0 0.0
        %538 = vmatmul.mubr.f32.gmra.mxu0 %v465
        %v539 = vpop.f32.mrf.mxu0
        %v540 = vadd.f32 %v458, %v539
        %v541 = vpop.f32.mrf.mxu0
        %v542 = vadd.f32 %v458, %v541
        %543 = vdwg.mxu0
        %v544 = vmax.f32 %v534, 0.0
        %v545 = vmax.f32 %v536, 0.0
        %v546 = vmax.f32 %v540, 0.0
        %v547 = vmax.f32 %v542, 0.0
        %548 = vst [vmem:[#allocation2 + $0x8] sm:$0xff] %v544
        %549 = vst [vmem:[#allocation2 + $0x10] sm:$0xff] %v545
        %550 = vst [vmem:[#allocation2 + $0x28] sm:$0xff] %v546
        %551 = vst [vmem:[#allocation2 + $0x30] sm:$0xff] %v547
        %s552 = scalar_lea.vmem [#allocation6], 128
        %v553 = vld [vmem:[%s552] sm:$0xff]
        %v554 = vld [vmem:[%s552 + $0x8] sm:$0xff]
        %v555 = vld [vmem:[%s552 + $0x10] sm:$0xff]
        %v556 = vld [vmem:[%s552 + $0x18] sm:$0xff]
        %v557 = vmul.f32 %v544, %v553
        %v558 = vmul.f32 %v545, %v554
        %v559 = vmul.f32 %v546, %v555
        %v560 = vmul.f32 %v547, %v556
        %v561 = vld [vmem:[#allocation2] sm:$0xff]
        %v562 = vld [vmem:[#allocation2 + $0x8] sm:$0xff]
        %v563 = vld [vmem:[#allocation2 + $0x10] sm:$0xff]
        %v564 = vld [vmem:[#allocation2 + $0x20] sm:$0xff]
        %v565 = vld [vmem:[#allocation2 + $0x28] sm:$0xff]
        %v566 = vld [vmem:[#allocation2 + $0x30] sm:$0xff]
        %v567 = vld [vmem:[#allocation6] sm:$0xff]
        %v568 = vld [vmem:[#allocation6 + $0x8] sm:$0xff]
        %v569 = vld [vmem:[#allocation6 + $0x10] sm:$0xff]
        %v570 = vld [vmem:[#allocation6 + $0x18] sm:$0xff]
        %575 = vrot.lane.b32.xlu0 %v567, 111
        %v576 = vpop.permute.xlu0 %575
        %577 = vrot.lane.b32.xlu0 %v568, 111
        %v578 = vpop.permute.xlu0 %577
        %579 = vrot.lane.b32.xlu0 %v569, 111
        %v580 = vpop.permute.xlu0 %579
        %581 = vrot.lane.b32.xlu0 %v570, 111
        %v582 = vpop.permute.xlu0 %581
        %vm583 = vcmask 908288
        %v584 = vsel %vm583, %v576, %v578
        %v585 = vsel %vm583, %v580, %v582
        %v592 = vmul.f32 %v561, %v576
        %v593 = vmul.f32 %v562, %v584
        %v594 = vmul.f32 %v563, %v578
        %v595 = vmul.f32 %v564, %v580
        %v596 = vmul.f32 %v565, %v585
        %v597 = vmul.f32 %v566, %v582
        %604 = vrot.lane.b32.xlu0 %v592, 17
        %v605 = vpop.permute.xlu0 %604
        %606 = vrot.lane.b32.xlu0 %v593, 17
        %v607 = vpop.permute.xlu0 %606
        %608 = vrot.lane.b32.xlu0 %v594, 17
        %v609 = vpop.permute.xlu0 %608
        %610 = vrot.lane.b32.xlu0 %v595, 17
        %v611 = vpop.permute.xlu0 %610
        %612 = vrot.lane.b32.xlu0 %v596, 17
        %v613 = vpop.permute.xlu0 %612
        %614 = vrot.lane.b32.xlu0 %v597, 17
        %v615 = vpop.permute.xlu0 %614
        %vm616 = vcmask 138240
        %v617 = vsel %vm616, %v605, %v607
        %v618 = vsel %vm616, %v607, %v609
        %v619 = vsel %vm616, %v611, %v613
        %v620 = vsel %vm616, %v613, %v615
        %v625 = vadd.f32 %v557, %v617
        %v626 = vadd.f32 %v558, %v618
        %v627 = vadd.f32 %v559, %v619
        %v628 = vadd.f32 %v560, %v620
        %s629 = scalar_lea.vmem [#allocation6], 32
        %v630 = vld [vmem:[%s629] sm:$0xff]
        %v631 = vld [vmem:[%s629 + $0x8] sm:$0xff]
        %v632 = vld [vmem:[%s629 + $0x10] sm:$0xff]
        %v633 = vld [vmem:[%s629 + $0x18] sm:$0xff]
        %638 = vrot.lane.b32.xlu0 %v630, 112
        %v639 = vpop.permute.xlu0 %638
        %640 = vrot.lane.b32.xlu0 %v631, 112
        %v641 = vpop.permute.xlu0 %640
        %642 = vrot.lane.b32.xlu0 %v632, 112
        %v643 = vpop.permute.xlu0 %642
        %644 = vrot.lane.b32.xlu0 %v633, 112
        %v645 = vpop.permute.xlu0 %644
        %vm646 = vcmask 916480
        %v647 = vsel %vm646, %v639, %v641
        %v648 = vsel %vm646, %v643, %v645
        %v655 = vmul.f32 %v561, %v639
        %v656 = vmul.f32 %v562, %v647
        %v657 = vmul.f32 %v563, %v641
        %v658 = vmul.f32 %v564, %v643
        %v659 = vmul.f32 %v565, %v648
        %v660 = vmul.f32 %v566, %v645
        %667 = vrot.lane.b32.xlu0 %v655, 16
        %v668 = vpop.permute.xlu0 %667
        %669 = vrot.lane.b32.xlu0 %v656, 16
        %v670 = vpop.permute.xlu0 %669
        %671 = vrot.lane.b32.xlu0 %v657, 16
        %v672 = vpop.permute.xlu0 %671
        %673 = vrot.lane.b32.xlu0 %v658, 16
        %v674 = vpop.permute.xlu0 %673
        %675 = vrot.lane.b32.xlu0 %v659, 16
        %v676 = vpop.permute.xlu0 %675
        %677 = vrot.lane.b32.xlu0 %v660, 16
        %v678 = vpop.permute.xlu0 %677
        %v679 = vsel %vm460, %v668, %v670
        %v680 = vsel %vm460, %v670, %v672
        %v681 = vsel %vm460, %v674, %v676
        %v682 = vsel %vm460, %v676, %v678
        %v687 = vadd.f32 %v625, %v679
        %v688 = vadd.f32 %v626, %v680
        %v689 = vadd.f32 %v627, %v681
        %v690 = vadd.f32 %v628, %v682
        %s691 = scalar_lea.vmem [#allocation6], 64
        %v692 = vld [vmem:[%s691] sm:$0xff]
        %v693 = vld [vmem:[%s691 + $0x8] sm:$0xff]
        %v694 = vld [vmem:[%s691 + $0x10] sm:$0xff]
        %v695 = vld [vmem:[%s691 + $0x18] sm:$0xff]
        %700 = vrot.lane.b32.xlu0 %v692, 113
        %v701 = vpop.permute.xlu0 %700
        %702 = vrot.lane.b32.xlu0 %v693, 113
        %v703 = vpop.permute.xlu0 %702
        %704 = vrot.lane.b32.xlu0 %v694, 113
        %v705 = vpop.permute.xlu0 %704
        %706 = vrot.lane.b32.xlu0 %v695, 113
        %v707 = vpop.permute.xlu0 %706
        %vm708 = vcmask 924672
        %v709 = vsel %vm708, %v701, %v703
        %v710 = vsel %vm708, %v705, %v707
        %v717 = vmul.f32 %v561, %v701
        %v718 = vmul.f32 %v562, %v709
        %v719 = vmul.f32 %v563, %v703
        %v720 = vmul.f32 %v564, %v705
        %v721 = vmul.f32 %v565, %v710
        %v722 = vmul.f32 %v566, %v707
        %729 = vrot.lane.b32.xlu0 %v717, 15
        %v730 = vpop.permute.xlu0 %729
        %731 = vrot.lane.b32.xlu0 %v718, 15
        %v732 = vpop.permute.xlu0 %731
        %733 = vrot.lane.b32.xlu0 %v719, 15
        %v734 = vpop.permute.xlu0 %733
        %735 = vrot.lane.b32.xlu0 %v720, 15
        %v736 = vpop.permute.xlu0 %735
        %737 = vrot.lane.b32.xlu0 %v721, 15
        %v738 = vpop.permute.xlu0 %737
        %739 = vrot.lane.b32.xlu0 %v722, 15
        %v740 = vpop.permute.xlu0 %739
        %vm741 = vcmask 121856
        %v742 = vsel %vm741, %v730, %v732
        %v743 = vsel %vm741, %v732, %v734
        %v744 = vsel %vm741, %v736, %v738
        %v745 = vsel %vm741, %v738, %v740
        %v750 = vadd.f32 %v687, %v742
        %v751 = vadd.f32 %v688, %v743
        %v752 = vadd.f32 %v689, %v744
        %v753 = vadd.f32 %v690, %v745
        %s754 = scalar_lea.vmem [#allocation6], 96
        %v755 = vld [vmem:[%s754] sm:$0xff]
        %v756 = vld [vmem:[%s754 + $0x8] sm:$0xff]
        %v757 = vld [vmem:[%s754 + $0x10] sm:$0xff]
        %v758 = vld [vmem:[%s754 + $0x18] sm:$0xff]
        %763 = vrot.lane.b32.xlu0 %v755, 127
        %v764 = vpop.permute.xlu0 %763
        %765 = vrot.lane.b32.xlu0 %v756, 127
        %v766 = vpop.permute.xlu0 %765
        %767 = vrot.lane.b32.xlu0 %v757, 127
        %v768 = vpop.permute.xlu0 %767
        %769 = vrot.lane.b32.xlu0 %v758, 127
        %v770 = vpop.permute.xlu0 %769
        %vm771 = vcmask 1039360
        %v772 = vsel %vm771, %v764, %v766
        %v773 = vsel %vm771, %v768, %v770
        %v780 = vmul.f32 %v561, %v764
        %v781 = vmul.f32 %v562, %v772
        %v782 = vmul.f32 %v563, %v766
        %v783 = vmul.f32 %v564, %v768
        %v784 = vmul.f32 %v565, %v773
        %v785 = vmul.f32 %v566, %v770
        %792 = vrot.lane.b32.xlu0 %v780, 1
        %v793 = vpop.permute.xlu0 %792
        %794 = vrot.lane.b32.xlu0 %v781, 1
        %v795 = vpop.permute.xlu0 %794
        %796 = vrot.lane.b32.xlu0 %v782, 1
        %v797 = vpop.permute.xlu0 %796
        %798 = vrot.lane.b32.xlu0 %v783, 1
        %v799 = vpop.permute.xlu0 %798
        %800 = vrot.lane.b32.xlu0 %v784, 1
        %v801 = vpop.permute.xlu0 %800
        %802 = vrot.lane.b32.xlu0 %v785, 1
        %v803 = vpop.permute.xlu0 %802
        %vm804 = vcmask 7168
        %v805 = vsel %vm804, %v793, %v795
        %v806 = vsel %vm804, %v795, %v797
        %v807 = vsel %vm804, %v799, %v801
        %v808 = vsel %vm804, %v801, %v803
        %v813 = vadd.f32 %v750, %v805
        %v814 = vadd.f32 %v751, %v806
        %v815 = vadd.f32 %v752, %v807
        %v816 = vadd.f32 %v753, %v808
        %v817 = vld [vmem:[#allocation2 + $0x8] sm:$0xff]
        %v818 = vld [vmem:[#allocation2 + $0x10] sm:$0xff]
        %v819 = vld [vmem:[#allocation2 + $0x18] sm:$0xff]
        %v820 = vld [vmem:[#allocation2 + $0x28] sm:$0xff]
        %v821 = vld [vmem:[#allocation2 + $0x30] sm:$0xff]
        %v822 = vld [vmem:[#allocation2 + $0x38] sm:$0xff]
        %s823 = scalar_lea.vmem [#allocation6], 160
        %v824 = vld [vmem:[%s823] sm:$0xff]
        %v825 = vld [vmem:[%s823 + $0x8] sm:$0xff]
        %v826 = vld [vmem:[%s823 + $0x10] sm:$0xff]
        %v827 = vld [vmem:[%s823 + $0x18] sm:$0xff]
        %832 = vrot.lane.b32.xlu0 %v824, 1
        %v833 = vpop.permute.xlu0 %832
        %834 = vrot.lane.b32.xlu0 %v825, 1
        %v835 = vpop.permute.xlu0 %834
        %836 = vrot.lane.b32.xlu0 %v826, 1
        %v837 = vpop.permute.xlu0 %836
        %838 = vrot.lane.b32.xlu0 %v827, 1
        %v839 = vpop.permute.xlu0 %838
        %v840 = vsel %vm804, %v833, %v835
        %v841 = vsel %vm804, %v837, %v839
        %v848 = vmul.f32 %v817, %v833
        %v849 = vmul.f32 %v818, %v840
        %v850 = vmul.f32 %v819, %v835
        %v851 = vmul.f32 %v820, %v837
        %v852 = vmul.f32 %v821, %v841
        %v853 = vmul.f32 %v822, %v839
        %860 = vrot.lane.b32.xlu0 %v848, 127
        %v861 = vpop.permute.xlu0 %860
        %862 = vrot.lane.b32.xlu0 %v849, 127
        %v863 = vpop.permute.xlu0 %862
        %864 = vrot.lane.b32.xlu0 %v850, 127
        %v865 = vpop.permute.xlu0 %864
        %866 = vrot.lane.b32.xlu0 %v851, 127
        %v867 = vpop.permute.xlu0 %866
        %868 = vrot.lane.b32.xlu0 %v852, 127
        %v869 = vpop.permute.xlu0 %868
        %870 = vrot.lane.b32.xlu0 %v853, 127
        %v871 = vpop.permute.xlu0 %870
        %v872 = vsel %vm771, %v861, %v863
        %v873 = vsel %vm771, %v863, %v865
        %v874 = vsel %vm771, %v867, %v869
        %v875 = vsel %vm771, %v869, %v871
        %v880 = vadd.f32 %v813, %v872
        %v881 = vadd.f32 %v814, %v873
        %v882 = vadd.f32 %v815, %v874
        %v883 = vadd.f32 %v816, %v875
        %s884 = scalar_lea.vmem [#allocation6], 192
        %v885 = vld [vmem:[%s884] sm:$0xff]
        %v886 = vld [vmem:[%s884 + $0x8] sm:$0xff]
        %v887 = vld [vmem:[%s884 + $0x10] sm:$0xff]
        %v888 = vld [vmem:[%s884 + $0x18] sm:$0xff]
        %893 = vrot.lane.b32.xlu0 %v885, 15
        %v894 = vpop.permute.xlu0 %893
        %895 = vrot.lane.b32.xlu0 %v886, 15
        %v896 = vpop.permute.xlu0 %895
        %897 = vrot.lane.b32.xlu0 %v887, 15
        %v898 = vpop.permute.xlu0 %897
        %899 = vrot.lane.b32.xlu0 %v888, 15
        %v900 = vpop.permute.xlu0 %899
        %v901 = vsel %vm741, %v894, %v896
        %v902 = vsel %vm741, %v898, %v900
        %v909 = vmul.f32 %v817, %v894
        %v910 = vmul.f32 %v818, %v901
        %v911 = vmul.f32 %v819, %v896
        %v912 = vmul.f32 %v820, %v898
        %v913 = vmul.f32 %v821, %v902
        %v914 = vmul.f32 %v822, %v900
        %921 = vrot.lane.b32.xlu0 %v909, 113
        %v922 = vpop.permute.xlu0 %921
        %923 = vrot.lane.b32.xlu0 %v910, 113
        %v924 = vpop.permute.xlu0 %923
        %925 = vrot.lane.b32.xlu0 %v911, 113
        %v926 = vpop.permute.xlu0 %925
        %927 = vrot.lane.b32.xlu0 %v912, 113
        %v928 = vpop.permute.xlu0 %927
        %929 = vrot.lane.b32.xlu0 %v913, 113
        %v930 = vpop.permute.xlu0 %929
        %931 = vrot.lane.b32.xlu0 %v914, 113
        %v932 = vpop.permute.xlu0 %931
        %v933 = vsel %vm708, %v922, %v924
        %v934 = vsel %vm708, %v924, %v926
        %v935 = vsel %vm708, %v928, %v930
        %v936 = vsel %vm708, %v930, %v932
        %v941 = vadd.f32 %v880, %v933
        %v942 = vadd.f32 %v881, %v934
        %v943 = vadd.f32 %v882, %v935
        %v944 = vadd.f32 %v883, %v936
        %s945 = scalar_lea.vmem [#allocation6], 224
        %v946 = vld [vmem:[%s945] sm:$0xff]
        %v947 = vld [vmem:[%s945 + $0x8] sm:$0xff]
        %v948 = vld [vmem:[%s945 + $0x10] sm:$0xff]
        %v949 = vld [vmem:[%s945 + $0x18] sm:$0xff]
        %954 = vrot.lane.b32.xlu0 %v946, 16
        %v955 = vpop.permute.xlu0 %954
        %956 = vrot.lane.b32.xlu0 %v947, 16
        %v957 = vpop.permute.xlu0 %956
        %958 = vrot.lane.b32.xlu0 %v948, 16
        %v959 = vpop.permute.xlu0 %958
        %960 = vrot.lane.b32.xlu0 %v949, 16
        %v961 = vpop.permute.xlu0 %960
        %v962 = vsel %vm460, %v955, %v957
        %v963 = vsel %vm460, %v959, %v961
        %v970 = vmul.f32 %v817, %v955
        %v971 = vmul.f32 %v818, %v962
        %v972 = vmul.f32 %v819, %v957
        %v973 = vmul.f32 %v820, %v959
        %v974 = vmul.f32 %v821, %v963
        %v975 = vmul.f32 %v822, %v961
        %982 = vrot.lane.b32.xlu0 %v970, 112
        %v983 = vpop.permute.xlu0 %982
        %984 = vrot.lane.b32.xlu0 %v971, 112
        %v985 = vpop.permute.xlu0 %984
        %986 = vrot.lane.b32.xlu0 %v972, 112
        %v987 = vpop.permute.xlu0 %986
        %988 = vrot.lane.b32.xlu0 %v973, 112
        %v989 = vpop.permute.xlu0 %988
        %990 = vrot.lane.b32.xlu0 %v974, 112
        %v991 = vpop.permute.xlu0 %990
        %992 = vrot.lane.b32.xlu0 %v975, 112
        %v993 = vpop.permute.xlu0 %992
        %v994 = vsel %vm646, %v983, %v985
        %v995 = vsel %vm646, %v985, %v987
        %v996 = vsel %vm646, %v989, %v991
        %v997 = vsel %vm646, %v991, %v993
        %v1002 = vadd.f32 %v941, %v994
        %v1003 = vadd.f32 %v942, %v995
        %v1004 = vadd.f32 %v943, %v996
        %v1005 = vadd.f32 %v944, %v997
        %s1006 = scalar_lea.vmem [#allocation6], 256
        %v1007 = vld [vmem:[%s1006] sm:$0xff]
        %v1008 = vld [vmem:[%s1006 + $0x8] sm:$0xff]
        %v1009 = vld [vmem:[%s1006 + $0x10] sm:$0xff]
        %v1010 = vld [vmem:[%s1006 + $0x18] sm:$0xff]
        %1015 = vrot.lane.b32.xlu0 %v1007, 17
        %v1016 = vpop.permute.xlu0 %1015
        %1017 = vrot.lane.b32.xlu0 %v1008, 17
        %v1018 = vpop.permute.xlu0 %1017
        %1019 = vrot.lane.b32.xlu0 %v1009, 17
        %v1020 = vpop.permute.xlu0 %1019
        %1021 = vrot.lane.b32.xlu0 %v1010, 17
        %v1022 = vpop.permute.xlu0 %1021
        %v1023 = vsel %vm616, %v1016, %v1018
        %v1024 = vsel %vm616, %v1020, %v1022
        %v1031 = vmul.f32 %v817, %v1016
        %v1032 = vmul.f32 %v818, %v1023
        %v1033 = vmul.f32 %v819, %v1018
        %v1034 = vmul.f32 %v820, %v1020
        %v1035 = vmul.f32 %v821, %v1024
        %v1036 = vmul.f32 %v822, %v1022
        %1043 = vrot.lane.b32.xlu0 %v1031, 111
        %v1044 = vpop.permute.xlu0 %1043
        %1045 = vrot.lane.b32.xlu0 %v1032, 111
        %v1046 = vpop.permute.xlu0 %1045
        %1047 = vrot.lane.b32.xlu0 %v1033, 111
        %v1048 = vpop.permute.xlu0 %1047
        %1049 = vrot.lane.b32.xlu0 %v1034, 111
        %v1050 = vpop.permute.xlu0 %1049
        %1051 = vrot.lane.b32.xlu0 %v1035, 111
        %v1052 = vpop.permute.xlu0 %1051
        %1053 = vrot.lane.b32.xlu0 %v1036, 111
        %v1054 = vpop.permute.xlu0 %1053
        %v1055 = vsel %vm583, %v1044, %v1046
        %v1056 = vsel %vm583, %v1046, %v1048
        %v1057 = vsel %vm583, %v1050, %v1052
        %v1058 = vsel %vm583, %v1052, %v1054
        %v1063 = vadd.f32 %v1002, %v1055
        %v1064 = vadd.f32 %v1003, %v1056
        %v1065 = vadd.f32 %v1004, %v1057
        %v1066 = vadd.f32 %v1005, %v1058
        %1067 = vset.pattern.permute.xlu0 1
        %1068 = vperm.xlu0 %1067, %v446
        %v1069 = vpop.permute.xlu0 %1068
        %1071 = vset.pattern.permute.xlu0 1
        %1072 = vperm.xlu0 %1071, %v447
        %v1073 = vpop.permute.xlu0 %1072
        %v1075 = vadd.f32 %v1063, %v1069
        %v1076 = vadd.f32 %v1064, %v1069
        %v1077 = vadd.f32 %v1065, %v1073
        %v1078 = vadd.f32 %v1066, %v1073
        %v1079 = vmax.f32 %v1075, 0.0
        %v1080 = vmax.f32 %v1076, 0.0
        %v1081 = vmax.f32 %v1077, 0.0
        %v1082 = vmax.f32 %v1078, 0.0
        %v1083 = vld [vmem:[#allocation9] sm:$0xff]
        %v1084 = vld [vmem:[#allocation9 + $0x8] sm:$0xff]
        %v1085 = vld [vmem:[#allocation9 + $0x10] sm:$0xff]
        %v1086 = vld [vmem:[#allocation9 + $0x18] sm:$0xff]
        %v1087 = vld [vmem:[#allocation9 + $0x20] sm:$0xff]
        %v1088 = vld [vmem:[#allocation9 + $0x28] sm:$0xff]
        %v1089 = vld [vmem:[#allocation9 + $0x30] sm:$0xff]
        %v1090 = vld [vmem:[#allocation9 + $0x38] sm:$0xff]
        %v1091 = vld [vmem:[#allocation9 + $0x40] sm:$0xff]
        %v1092 = vld [vmem:[#allocation9 + $0x48] sm:$0xff]
        %v1093 = vld [vmem:[#allocation9 + $0x50] sm:$0xff]
        %v1094 = vld [vmem:[#allocation9 + $0x58] sm:$0xff]
        %v1095 = vld [vmem:[#allocation9 + $0x60] sm:$0xff]
        %v1096 = vld [vmem:[#allocation9 + $0x68] sm:$0xff]
        %v1097 = vld [vmem:[#allocation9 + $0x70] sm:$0xff]
        %v1098 = vld [vmem:[#allocation9 + $0x78] sm:$0xff]
        %v1099 = vld [vmem:[#allocation9 + $0x80] sm:$0xff]
        %v1100 = vld [vmem:[#allocation9 + $0x88] sm:$0xff]
        %v1101 = vld [vmem:[#allocation9 + $0x90] sm:$0xff]
        %v1102 = vld [vmem:[#allocation9 + $0x98] sm:$0xff]
        %v1103 = vld [vmem:[#allocation9 + $0xa0] sm:$0xff]
        %v1104 = vld [vmem:[#allocation9 + $0xa8] sm:$0xff]
        %v1105 = vld [vmem:[#allocation9 + $0xb0] sm:$0xff]
        %v1106 = vld [vmem:[#allocation9 + $0xb8] sm:$0xff]
        %v1107 = vld [vmem:[#allocation9 + $0xc0] sm:$0xff]
        %v1108 = vld [vmem:[#allocation9 + $0xc8] sm:$0xff]
        %v1109 = vld [vmem:[#allocation9 + $0xd0] sm:$0xff]
        %v1110 = vld [vmem:[#allocation9 + $0xd8] sm:$0xff]
        %v1111 = vld [vmem:[#allocation9 + $0xe0] sm:$0xff]
        %v1112 = vld [vmem:[#allocation9 + $0xe8] sm:$0xff]
        %v1113 = vld [vmem:[#allocation9 + $0xf0] sm:$0xff]
        %v1114 = vld [vmem:[#allocation9 + $0xf8] sm:$0xff]
        %1115 = vmatprep.subr.mxu0 0.0
        %1116 = vmatpush1.msra.mxu0 %v1098
        %1117 = vmatprep.subr.mxu0 0.0
        %1118 = vmatpush1.msra.mxu0 %v1097
        %1119 = vmatprep.subr.mxu0 0.0
        %1120 = vmatpush1.msra.mxu0 %v1096
        %1121 = vmatprep.subr.mxu0 0.0
        %1122 = vmatpush1.msra.mxu0 %v1095
        %1123 = vmatprep.subr.mxu0 0.0
        %1124 = vmatpush1.msra.mxu0 %v1094
        %1125 = vmatprep.subr.mxu0 0.0
        %1126 = vmatpush1.msra.mxu0 %v1093
        %1127 = vmatprep.subr.mxu0 0.0
        %1128 = vmatpush1.msra.mxu0 %v1092
        %1129 = vmatprep.subr.mxu0 0.0
        %1130 = vmatpush1.msra.mxu0 %v1091
        %1131 = vmatprep.subr.mxu0 0.0
        %1132 = vmatpush1.msra.mxu0 %v1090
        %1133 = vmatprep.subr.mxu0 0.0
        %1134 = vmatpush1.msra.mxu0 %v1089
        %1135 = vmatprep.subr.mxu0 0.0
        %1136 = vmatpush1.msra.mxu0 %v1088
        %1137 = vmatprep.subr.mxu0 0.0
        %1138 = vmatpush1.msra.mxu0 %v1087
        %1139 = vmatprep.subr.mxu0 0.0
        %1140 = vmatpush1.msra.mxu0 %v1086
        %1141 = vmatprep.subr.mxu0 0.0
        %1142 = vmatpush1.msra.mxu0 %v1085
        %1143 = vmatprep.subr.mxu0 0.0
        %1144 = vmatpush1.msra.mxu0 %v1084
        %1145 = vmatprep.subr.mxu0 0.0
        %1146 = vmatpush1.msra.mxu0 %v1083
        %1147 = vmatprep.subr.mxu0 0.0
        %1148 = vmatpush2.msra.mxu0 %v1114
        %1149 = vmatprep.subr.mxu0 0.0
        %1150 = vmatpush2.msra.mxu0 %v1113
        %1151 = vmatprep.subr.mxu0 0.0
        %1152 = vmatpush2.msra.mxu0 %v1112
        %1153 = vmatprep.subr.mxu0 0.0
        %1154 = vmatpush2.msra.mxu0 %v1111
        %1155 = vmatprep.subr.mxu0 0.0
        %1156 = vmatpush2.msra.mxu0 %v1110
        %1157 = vmatprep.subr.mxu0 0.0
        %1158 = vmatpush2.msra.mxu0 %v1109
        %1159 = vmatprep.subr.mxu0 0.0
        %1160 = vmatpush2.msra.mxu0 %v1108
        %1161 = vmatprep.subr.mxu0 0.0
        %1162 = vmatpush2.msra.mxu0 %v1107
        %1163 = vmatprep.subr.mxu0 0.0
        %1164 = vmatpush2.msra.mxu0 %v1106
        %1165 = vmatprep.subr.mxu0 0.0
        %1166 = vmatpush2.msra.mxu0 %v1105
        %1167 = vmatprep.subr.mxu0 0.0
        %1168 = vmatpush2.msra.mxu0 %v1104
        %1169 = vmatprep.subr.mxu0 0.0
        %1170 = vmatpush2.msra.mxu0 %v1103
        %1171 = vmatprep.subr.mxu0 0.0
        %1172 = vmatpush2.msra.mxu0 %v1102
        %1173 = vmatprep.subr.mxu0 0.0
        %1174 = vmatpush2.msra.mxu0 %v1101
        %1175 = vmatprep.subr.mxu0 0.0
        %1176 = vmatpush2.msra.mxu0 %v1100
        %1177 = vmatprep.subr.mxu0 0.0
        %1178 = vmatpush2.msra.mxu0 %v1099
        %1179 = vmatprep.mubr.f32.mxu0 %v545
        %1180 = vmatmul.mubr.f32.gmra.mxu0 %v544
        %v1181 = vpop.f32.mrf.mxu0
        %v1182 = vadd.f32 0.0, %v1181
        %v1183 = vpop.f32.mrf.mxu0
        %1184 = vmatprep.mubr.f32.mxu0 %v547
        %1185 = vmatmul.mubr.f32.gmra.mxu0 %v546
        %v1186 = vpop.f32.mrf.mxu0
        %v1187 = vadd.f32 0.0, %v1186
        %v1188 = vpop.f32.mrf.mxu0
        %1189 = vdwg.mxu0
        %1190 = vmatprep.subr.mxu0 0.0
        %1191 = vmatpush1.msra.mxu0 %v1098
        %1192 = vmatprep.subr.mxu0 0.0
        %1193 = vmatpush1.msra.mxu0 %v1097
        %1194 = vmatprep.subr.mxu0 0.0
        %1195 = vmatpush1.msra.mxu0 %v1096
        %1196 = vmatprep.subr.mxu0 0.0
        %1197 = vmatpush1.msra.mxu0 %v1095
        %1198 = vmatprep.subr.mxu0 0.0
        %1199 = vmatpush1.msra.mxu0 %v1094
        %1200 = vmatprep.subr.mxu0 0.0
        %1201 = vmatpush1.msra.mxu0 %v1093
        %1202 = vmatprep.subr.mxu0 0.0
        %1203 = vmatpush1.msra.mxu0 %v1092
        %1204 = vmatprep.subr.mxu0 0.0
        %1205 = vmatpush1.msra.mxu0 %v1091
        %1206 = vmatprep.subr.mxu0 0.0
        %1207 = vmatpush1.msra.mxu0 %v1090
        %1208 = vmatprep.subr.mxu0 0.0
        %1209 = vmatpush1.msra.mxu0 %v1089
        %1210 = vmatprep.subr.mxu0 0.0
        %1211 = vmatpush1.msra.mxu0 %v1088
        %1212 = vmatprep.subr.mxu0 0.0
        %1213 = vmatpush1.msra.mxu0 %v1087
        %1214 = vmatprep.subr.mxu0 0.0
        %1215 = vmatpush1.msra.mxu0 %v1086
        %1216 = vmatprep.subr.mxu0 0.0
        %1217 = vmatpush1.msra.mxu0 %v1085
        %1218 = vmatprep.subr.mxu0 0.0
        %1219 = vmatpush1.msra.mxu0 %v1084
        %1220 = vmatprep.subr.mxu0 0.0
        %1221 = vmatpush1.msra.mxu0 %v1083
        %1222 = vmatprep.subr.mxu0 0.0
        %1223 = vmatpush2.msra.mxu0 %v1114
        %1224 = vmatprep.subr.mxu0 0.0
        %1225 = vmatpush2.msra.mxu0 %v1113
        %1226 = vmatprep.subr.mxu0 0.0
        %1227 = vmatpush2.msra.mxu0 %v1112
        %1228 = vmatprep.subr.mxu0 0.0
        %1229 = vmatpush2.msra.mxu0 %v1111
        %1230 = vmatprep.subr.mxu0 0.0
        %1231 = vmatpush2.msra.mxu0 %v1110
        %1232 = vmatprep.subr.mxu0 0.0
        %1233 = vmatpush2.msra.mxu0 %v1109
        %1234 = vmatprep.subr.mxu0 0.0
        %1235 = vmatpush2.msra.mxu0 %v1108
        %1236 = vmatprep.subr.mxu0 0.0
        %1237 = vmatpush2.msra.mxu0 %v1107
        %1238 = vmatprep.subr.mxu0 0.0
        %1239 = vmatpush2.msra.mxu0 %v1106
        %1240 = vmatprep.subr.mxu0 0.0
        %1241 = vmatpush2.msra.mxu0 %v1105
        %1242 = vmatprep.subr.mxu0 0.0
        %1243 = vmatpush2.msra.mxu0 %v1104
        %1244 = vmatprep.subr.mxu0 0.0
        %1245 = vmatpush2.msra.mxu0 %v1103
        %1246 = vmatprep.subr.mxu0 0.0
        %1247 = vmatpush2.msra.mxu0 %v1102
        %1248 = vmatprep.subr.mxu0 0.0
        %1249 = vmatpush2.msra.mxu0 %v1101
        %1250 = vmatprep.subr.mxu0 0.0
        %1251 = vmatpush2.msra.mxu0 %v1100
        %1252 = vmatprep.subr.mxu0 0.0
        %1253 = vmatpush2.msra.mxu0 %v1099
        %1254 = vmatprep.mubr.f32.mxu0 %v1080
        %1255 = vmatmul.mubr.f32.gmra.mxu0 %v1079
        %v1256 = vpop.f32.mrf.mxu0
        %v1257 = vadd.f32 0.0, %v1256
        %v1258 = vpop.f32.mrf.mxu0
        %1259 = vmatprep.mubr.f32.mxu0 %v1082
        %1260 = vmatmul.mubr.f32.gmra.mxu0 %v1081
        %v1261 = vpop.f32.mrf.mxu0
        %v1262 = vadd.f32 0.0, %v1261
        %v1263 = vpop.f32.mrf.mxu0
        %1264 = vdwg.mxu0
        %v1265 = vld [vmem:[%s5] sm:$0xff]
        %vm1266 = vcmask 261120
        %v1268 = vsel %vm1266, %v1265, 0
        %1270 = vmatprep.subr.mxu0 0.0
        %1271 = vmatpush1.msra.mxu0 0.0
        %1272 = vmatprep.subr.mxu0 0.0
        %1273 = vmatpush1.msra.mxu0 0.0
        %1274 = vmatprep.subr.mxu0 0.0
        %1275 = vmatpush1.msra.mxu0 0.0
        %1276 = vmatprep.subr.mxu0 0.0
        %1277 = vmatpush1.msra.mxu0 0.0
        %1278 = vmatprep.subr.mxu0 0.0
        %1279 = vmatpush1.msra.mxu0 0.0
        %1280 = vmatprep.subr.mxu0 0.0
        %1281 = vmatpush1.msra.mxu0 0.0
        %1282 = vmatprep.subr.mxu0 0.0
        %1283 = vmatpush1.msra.mxu0 0.0
        %1284 = vmatprep.subr.mxu0 0.0
        %1285 = vmatpush1.msra.mxu0 0.0
        %1286 = vmatprep.subr.mxu0 0.0
        %1287 = vmatpush1.msra.mxu0 0.0
        %1288 = vmatprep.subr.mxu0 0.0
        %1289 = vmatpush1.msra.mxu0 0.0
        %1290 = vmatprep.subr.mxu0 0.0
        %1291 = vmatpush1.msra.mxu0 0.0
        %1292 = vmatprep.subr.mxu0 0.0
        %1293 = vmatpush1.msra.mxu0 0.0
        %1294 = vmatprep.subr.mxu0 0.0
        %1295 = vmatpush1.msra.mxu0 %v1262
        %1296 = vmatprep.subr.mxu0 0.0
        %1297 = vmatpush1.msra.mxu0 %v1257
        %1298 = vmatprep.subr.mxu0 0.0
        %1299 = vmatpush1.msra.mxu0 %v1187
        %1300 = vmatprep.subr.mxu0 0.0
        %1301 = vmatpush1.msra.mxu0 %v1182
        %1302 = vmatprep.subr.mxu0 0.0
        %1303 = vmatpush2.msra.mxu0 0.0
        %1304 = vmatprep.subr.mxu0 0.0
        %1305 = vmatpush2.msra.mxu0 0.0
        %1306 = vmatprep.subr.mxu0 0.0
        %1307 = vmatpush2.msra.mxu0 0.0
        %1308 = vmatprep.subr.mxu0 0.0
        %1309 = vmatpush2.msra.mxu0 0.0
        %1310 = vmatprep.subr.mxu0 0.0
        %1311 = vmatpush2.msra.mxu0 0.0
        %1312 = vmatprep.subr.mxu0 0.0
        %1313 = vmatpush2.msra.mxu0 0.0
        %1314 = vmatprep.subr.mxu0 0.0
        %1315 = vmatpush2.msra.mxu0 0.0
        %1316 = vmatprep.subr.mxu0 0.0
        %1317 = vmatpush2.msra.mxu0 0.0
        %1318 = vmatprep.subr.mxu0 0.0
        %1319 = vmatpush2.msra.mxu0 0.0
        %1320 = vmatprep.subr.mxu0 0.0
        %1321 = vmatpush2.msra.mxu0 0.0
        %1322 = vmatprep.subr.mxu0 0.0
        %1323 = vmatpush2.msra.mxu0 0.0
        %1324 = vmatprep.subr.mxu0 0.0
        %1325 = vmatpush2.msra.mxu0 0.0
        %1326 = vmatprep.subr.mxu0 0.0
        %1327 = vmatpush2.msra.mxu0 0.0
        %1328 = vmatprep.subr.mxu0 0.0
        %1329 = vmatpush2.msra.mxu0 0.0
        %1330 = vmatprep.subr.mxu0 0.0
        %1331 = vmatpush2.msra.mxu0 0.0
        %1332 = vmatprep.subr.mxu0 0.0
        %1333 = vmatpush2.msra.mxu0 0.0
        %1334 = vmatprep.mubr.f32.mxu0 0.0
        %1335 = vmatmul.mubr.f32.gmra.mxu0 %v1268
        %v1336 = vpop.f32.mrf.mxu0
        %v1337 = vadd.f32 0.0, %v1336
        %v1338 = vpop.f32.mrf.mxu0
        %1339 = vdwg.mxu0
        %v1340 = vmax.f32 %v1337, 0.0
        %v1341 = vld [vmem:[%s6] sm:$0xff]
        %v1342 = vld [vmem:[%s6 + $0x8] sm:$0xff]
        %v1343 = vld [vmem:[%s6 + $0x10] sm:$0xff]
        %v1344 = vld [vmem:[%s6 + $0x18] sm:$0xff]
        %vm1345 = vcmask 64512
        %v1347 = vsel %vm1345, %v1341, 0
        %v1350 = vsel %vm1345, %v1342, 0
        %v1353 = vsel %vm1345, %v1343, 0
        %v1356 = vsel %vm1345, %v1344, 0
        %1358 = vmatprep.subr.mxu0 0.0
        %1359 = vmatpush1.msra.mxu0 0.0
        %1360 = vmatprep.subr.mxu0 0.0
        %1361 = vmatpush1.msra.mxu0 0.0
        %1362 = vmatprep.subr.mxu0 0.0
        %1363 = vmatpush1.msra.mxu0 0.0
        %1364 = vmatprep.subr.mxu0 0.0
        %1365 = vmatpush1.msra.mxu0 0.0
        %1366 = vmatprep.subr.mxu0 0.0
        %1367 = vmatpush1.msra.mxu0 0.0
        %1368 = vmatprep.subr.mxu0 0.0
        %1369 = vmatpush1.msra.mxu0 0.0
        %1370 = vmatprep.subr.mxu0 0.0
        %1371 = vmatpush1.msra.mxu0 0.0
        %1372 = vmatprep.subr.mxu0 0.0
        %1373 = vmatpush1.msra.mxu0 0.0
        %1374 = vmatprep.subr.mxu0 0.0
        %1375 = vmatpush1.msra.mxu0 0.0
        %1376 = vmatprep.subr.mxu0 0.0
        %1377 = vmatpush1.msra.mxu0 0.0
        %1378 = vmatprep.subr.mxu0 0.0
        %1379 = vmatpush1.msra.mxu0 0.0
        %1380 = vmatprep.subr.mxu0 0.0
        %1381 = vmatpush1.msra.mxu0 0.0
        %1382 = vmatprep.subr.mxu0 0.0
        %1383 = vmatpush1.msra.mxu0 0.0
        %1384 = vmatprep.subr.mxu0 0.0
        %1385 = vmatpush1.msra.mxu0 0.0
        %1386 = vmatprep.subr.mxu0 0.0
        %1387 = vmatpush1.msra.mxu0 0.0
        %1388 = vmatprep.subr.mxu0 0.0
        %1389 = vmatpush1.msra.mxu0 %v1340
        %1390 = vmatprep.subr.mxu0 0.0
        %1391 = vmatpush2.msra.mxu0 0.0
        %1392 = vmatprep.subr.mxu0 0.0
        %1393 = vmatpush2.msra.mxu0 0.0
        %1394 = vmatprep.subr.mxu0 0.0
        %1395 = vmatpush2.msra.mxu0 0.0
        %1396 = vmatprep.subr.mxu0 0.0
        %1397 = vmatpush2.msra.mxu0 0.0
        %1398 = vmatprep.subr.mxu0 0.0
        %1399 = vmatpush2.msra.mxu0 0.0
        %1400 = vmatprep.subr.mxu0 0.0
        %1401 = vmatpush2.msra.mxu0 0.0
        %1402 = vmatprep.subr.mxu0 0.0
        %1403 = vmatpush2.msra.mxu0 0.0
        %1404 = vmatprep.subr.mxu0 0.0
        %1405 = vmatpush2.msra.mxu0 0.0
        %1406 = vmatprep.subr.mxu0 0.0
        %1407 = vmatpush2.msra.mxu0 0.0
        %1408 = vmatprep.subr.mxu0 0.0
        %1409 = vmatpush2.msra.mxu0 0.0
        %1410 = vmatprep.subr.mxu0 0.0
        %1411 = vmatpush2.msra.mxu0 0.0
        %1412 = vmatprep.subr.mxu0 0.0
        %1413 = vmatpush2.msra.mxu0 0.0
        %1414 = vmatprep.subr.mxu0 0.0
        %1415 = vmatpush2.msra.mxu0 0.0
        %1416 = vmatprep.subr.mxu0 0.0
        %1417 = vmatpush2.msra.mxu0 0.0
        %1418 = vmatprep.subr.mxu0 0.0
        %1419 = vmatpush2.msra.mxu0 0.0
        %1420 = vmatprep.subr.mxu0 0.0
        %1421 = vmatpush2.msra.mxu0 0.0
        %1422 = vmatprep.mubr.f32.mxu0 0.0
        %1423 = vmatmul.mubr.f32.gmra.mxu0 %v1347
        %v1424 = vpop.f32.mrf.mxu0
        %v1425 = vadd.f32 3.0, %v1424
        %v1426 = vpop.f32.mrf.mxu0
        %1427 = vmatprep.mubr.f32.mxu0 0.0
        %1428 = vmatmul.mubr.f32.gmra.mxu0 %v1350
        %v1429 = vpop.f32.mrf.mxu0
        %v1430 = vadd.f32 3.0, %v1429
        %v1431 = vpop.f32.mrf.mxu0
        %1432 = vmatprep.mubr.f32.mxu0 0.0
        %1433 = vmatmul.mubr.f32.gmra.mxu0 %v1353
        %v1434 = vpop.f32.mrf.mxu0
        %v1435 = vadd.f32 3.0, %v1434
        %v1436 = vpop.f32.mrf.mxu0
        %1437 = vmatprep.mubr.f32.mxu0 0.0
        %1438 = vmatmul.mubr.f32.gmra.mxu0 %v1356
        %v1439 = vpop.f32.mrf.mxu0
        %v1440 = vadd.f32 3.0, %v1439
        %v1441 = vpop.f32.mrf.mxu0
        %1442 = vdwg.mxu0
        %v1443 = vmax.f32 %v1425, 0.0
        %v1444 = vmax.f32 %v1430, 0.0
        %v1445 = vmax.f32 %v1435, 0.0
        %v1446 = vmax.f32 %v1440, 0.0
        %v1447 = vmin.f32 %v1443, 6.0
        %v1448 = vmin.f32 %v1444, 6.0
        %v1449 = vmin.f32 %v1445, 6.0
        %v1450 = vmin.f32 %v1446, 6.0
        %v1451 = vmul.f32 %v1447, 0.16666667
        %v1452 = vmul.f32 %v1448, 0.16666667
        %v1453 = vmul.f32 %v1449, 0.16666667
        %v1454 = vmul.f32 %v1450, 0.16666667
        %v1455 = vld [vmem:[#allocation11] sm:$0xff]
        %v1456 = vld [vmem:[#allocation11 + $0x8] sm:$0xff]
        %v1457 = vld [vmem:[#allocation11 + $0x10] sm:$0xff]
        %v1458 = vld [vmem:[#allocation11 + $0x18] sm:$0xff]
        %v1459 = vld [vmem:[#allocation11 + $0x20] sm:$0xff]
        %v1460 = vld [vmem:[#allocation11 + $0x28] sm:$0xff]
        %v1461 = vld [vmem:[#allocation11 + $0x30] sm:$0xff]
        %v1462 = vld [vmem:[#allocation11 + $0x38] sm:$0xff]
        %v1463 = vld [vmem:[#allocation11 + $0x40] sm:$0xff]
        %v1464 = vld [vmem:[#allocation11 + $0x48] sm:$0xff]
        %v1465 = vld [vmem:[#allocation11 + $0x50] sm:$0xff]
        %v1466 = vld [vmem:[#allocation11 + $0x58] sm:$0xff]
        %v1467 = vld [vmem:[#allocation11 + $0x60] sm:$0xff]
        %v1468 = vld [vmem:[#allocation11 + $0x68] sm:$0xff]
        %v1469 = vld [vmem:[#allocation11 + $0x70] sm:$0xff]
        %v1470 = vld [vmem:[#allocation11 + $0x78] sm:$0xff]
        %v1471 = vld [vmem:[#allocation11 + $0x80] sm:$0xff]
        %v1472 = vld [vmem:[#allocation11 + $0x88] sm:$0xff]
        %v1473 = vld [vmem:[#allocation11 + $0x90] sm:$0xff]
        %v1474 = vld [vmem:[#allocation11 + $0x98] sm:$0xff]
        %v1475 = vld [vmem:[#allocation11 + $0xa0] sm:$0xff]
        %v1476 = vld [vmem:[#allocation11 + $0xa8] sm:$0xff]
        %v1477 = vld [vmem:[#allocation11 + $0xb0] sm:$0xff]
        %v1478 = vld [vmem:[#allocation11 + $0xb8] sm:$0xff]
        %v1479 = vld [vmem:[#allocation11 + $0xc0] sm:$0xff]
        %v1480 = vld [vmem:[#allocation11 + $0xc8] sm:$0xff]
        %v1481 = vld [vmem:[#allocation11 + $0xd0] sm:$0xff]
        %v1482 = vld [vmem:[#allocation11 + $0xd8] sm:$0xff]
        %v1483 = vld [vmem:[#allocation11 + $0xe0] sm:$0xff]
        %v1484 = vld [vmem:[#allocation11 + $0xe8] sm:$0xff]
        %v1485 = vld [vmem:[#allocation11 + $0xf0] sm:$0xff]
        %v1486 = vld [vmem:[#allocation11 + $0xf8] sm:$0xff]
        %1487 = vmatprep.subr.mxu0 %v1486
        %1488 = vmatpush1.msra.mxu0 %v1485
        %1489 = vmatprep.subr.mxu0 %v1484
        %1490 = vmatpush1.msra.mxu0 %v1483
        %1491 = vmatprep.subr.mxu0 %v1482
        %1492 = vmatpush1.msra.mxu0 %v1481
        %1493 = vmatprep.subr.mxu0 %v1480
        %1494 = vmatpush1.msra.mxu0 %v1479
        %1495 = vmatprep.subr.mxu0 %v1478
        %1496 = vmatpush1.msra.mxu0 %v1477
        %1497 = vmatprep.subr.mxu0 %v1476
        %1498 = vmatpush1.msra.mxu0 %v1475
        %1499 = vmatprep.subr.mxu0 %v1474
        %1500 = vmatpush1.msra.mxu0 %v1473
        %1501 = vmatprep.subr.mxu0 %v1472
        %1502 = vmatpush1.msra.mxu0 %v1471
        %1503 = vmatprep.subr.mxu0 %v1470
        %1504 = vmatpush1.msra.mxu0 %v1469
        %1505 = vmatprep.subr.mxu0 %v1468
        %1506 = vmatpush1.msra.mxu0 %v1467
        %1507 = vmatprep.subr.mxu0 %v1466
        %1508 = vmatpush1.msra.mxu0 %v1465
        %1509 = vmatprep.subr.mxu0 %v1464
        %1510 = vmatpush1.msra.mxu0 %v1463
        %1511 = vmatprep.subr.mxu0 %v1462
        %1512 = vmatpush1.msra.mxu0 %v1461
        %1513 = vmatprep.subr.mxu0 %v1460
        %1514 = vmatpush1.msra.mxu0 %v1459
        %1515 = vmatprep.subr.mxu0 %v1458
        %1516 = vmatpush1.msra.mxu0 %v1457
        %1517 = vmatprep.subr.mxu0 %v1456
        %1518 = vmatpush1.msra.mxu0 %v1455
        %1519 = vmatprep.subr.mxu0 0.0
        %1520 = vmatpush2.msra.mxu0 0.0
        %1521 = vmatprep.subr.mxu0 0.0
        %1522 = vmatpush2.msra.mxu0 0.0
        %1523 = vmatprep.subr.mxu0 0.0
        %1524 = vmatpush2.msra.mxu0 0.0
        %1525 = vmatprep.subr.mxu0 0.0
        %1526 = vmatpush2.msra.mxu0 0.0
        %1527 = vmatprep.subr.mxu0 0.0
        %1528 = vmatpush2.msra.mxu0 0.0
        %1529 = vmatprep.subr.mxu0 0.0
        %1530 = vmatpush2.msra.mxu0 0.0
        %1531 = vmatprep.subr.mxu0 0.0
        %1532 = vmatpush2.msra.mxu0 0.0
        %1533 = vmatprep.subr.mxu0 0.0
        %1534 = vmatpush2.msra.mxu0 0.0
        %1535 = vmatprep.subr.mxu0 0.0
        %1536 = vmatpush2.msra.mxu0 0.0
        %1537 = vmatprep.subr.mxu0 0.0
        %1538 = vmatpush2.msra.mxu0 0.0
        %1539 = vmatprep.subr.mxu0 0.0
        %1540 = vmatpush2.msra.mxu0 0.0
        %1541 = vmatprep.subr.mxu0 0.0
        %1542 = vmatpush2.msra.mxu0 0.0
        %1543 = vmatprep.subr.mxu0 0.0
        %1544 = vmatpush2.msra.mxu0 0.0
        %1545 = vmatprep.subr.mxu0 0.0
        %1546 = vmatpush2.msra.mxu0 0.0
        %1547 = vmatprep.subr.mxu0 0.0
        %1548 = vmatpush2.msra.mxu0 0.0
        %1549 = vmatprep.subr.mxu0 0.0
        %1550 = vmatpush2.msra.mxu0 0.0
        %1551 = vmatprep.mubr.f32.mxu0 0.0
        %1552 = vmatmul.mubr.f32.gmra.mxu0 %v1451
        %v1553 = vpop.f32.mrf.mxu0
        %v1554 = vadd.f32 0.0, %v1553
        %v1555 = vpop.f32.mrf.mxu0
        %v1556 = vadd.f32 0.0, %v1555
        %1557 = vmatprep.mubr.f32.mxu0 0.0
        %1558 = vmatmul.mubr.f32.gmra.mxu0 %v1452
        %v1559 = vpop.f32.mrf.mxu0
        %v1560 = vadd.f32 0.0, %v1559
        %v1561 = vpop.f32.mrf.mxu0
        %v1562 = vadd.f32 0.0, %v1561
        %1563 = vmatprep.mubr.f32.mxu0 0.0
        %1564 = vmatmul.mubr.f32.gmra.mxu0 %v1453
        %v1565 = vpop.f32.mrf.mxu0
        %v1566 = vadd.f32 0.0, %v1565
        %v1567 = vpop.f32.mrf.mxu0
        %v1568 = vadd.f32 0.0, %v1567
        %1569 = vmatprep.mubr.f32.mxu0 0.0
        %1570 = vmatmul.mubr.f32.gmra.mxu0 %v1454
        %v1571 = vpop.f32.mrf.mxu0
        %v1572 = vadd.f32 0.0, %v1571
        %v1573 = vpop.f32.mrf.mxu0
        %v1574 = vadd.f32 0.0, %v1573
        %1575 = vdwg.mxu0
        %v1576 = vmul.f32 %v544, %v1554
        %v1577 = vmul.f32 %v545, %v1556
        %v1578 = vmul.f32 %v546, %v1560
        %v1579 = vmul.f32 %v547, %v1562
        %v1580 = vmul.f32 %v1079, %v1566
        %v1581 = vmul.f32 %v1080, %v1568
        %v1582 = vmul.f32 %v1081, %v1572
        %v1583 = vmul.f32 %v1082, %v1574
        %v1584 = vld [vmem:[%s3] sm:$0xff]
        %1586 = vrot.lane.b32.xlu0 %v1584, 112
        %v1587 = vpop.permute.xlu0 %1586
        %v1588 = vsel %vm460, %v1587, 0
        %1590 = vmatprep.subr.mxu0 0.0
        %1591 = vmatpush1.msra.mxu0 0.0
        %1592 = vmatprep.subr.mxu0 0.0
        %1593 = vmatpush1.msra.mxu0 0.0
        %1594 = vmatprep.subr.mxu0 0.0
        %1595 = vmatpush1.msra.mxu0 0.0
        %1596 = vmatprep.subr.mxu0 0.0
        %1597 = vmatpush1.msra.mxu0 0.0
        %1598 = vmatprep.subr.mxu0 0.0
        %1599 = vmatpush1.msra.mxu0 0.0
        %1600 = vmatprep.subr.mxu0 0.0
        %1601 = vmatpush1.msra.mxu0 0.0
        %1602 = vmatprep.subr.mxu0 0.0
        %1603 = vmatpush1.msra.mxu0 0.0
        %1604 = vmatprep.subr.mxu0 0.0
        %1605 = vmatpush1.msra.mxu0 0.0
        %1606 = vmatprep.subr.mxu0 0.0
        %1607 = vmatpush1.msra.mxu0 0.0
        %1608 = vmatprep.subr.mxu0 0.0
        %1609 = vmatpush1.msra.mxu0 0.0
        %1610 = vmatprep.subr.mxu0 0.0
        %1611 = vmatpush1.msra.mxu0 0.0
        %1612 = vmatprep.subr.mxu0 0.0
        %1613 = vmatpush1.msra.mxu0 0.0
        %1614 = vmatprep.subr.mxu0 0.0
        %1615 = vmatpush1.msra.mxu0 0.0
        %1616 = vmatprep.subr.mxu0 0.0
        %1617 = vmatpush1.msra.mxu0 0.0
        %1618 = vmatprep.subr.mxu0 %v1583
        %1619 = vmatpush1.msra.mxu0 %v1582
        %1620 = vmatprep.subr.mxu0 %v1581
        %1621 = vmatpush1.msra.mxu0 %v1580
        %1622 = vmatprep.subr.mxu0 0.0
        %1623 = vmatpush2.msra.mxu0 0.0
        %1624 = vmatprep.subr.mxu0 0.0
        %1625 = vmatpush2.msra.mxu0 0.0
        %1626 = vmatprep.subr.mxu0 0.0
        %1627 = vmatpush2.msra.mxu0 0.0
        %1628 = vmatprep.subr.mxu0 0.0
        %1629 = vmatpush2.msra.mxu0 0.0
        %1630 = vmatprep.subr.mxu0 0.0
        %1631 = vmatpush2.msra.mxu0 0.0
        %1632 = vmatprep.subr.mxu0 0.0
        %1633 = vmatpush2.msra.mxu0 0.0
        %1634 = vmatprep.subr.mxu0 0.0
        %1635 = vmatpush2.msra.mxu0 0.0
        %1636 = vmatprep.subr.mxu0 0.0
        %1637 = vmatpush2.msra.mxu0 0.0
        %1638 = vmatprep.subr.mxu0 0.0
        %1639 = vmatpush2.msra.mxu0 0.0
        %1640 = vmatprep.subr.mxu0 0.0
        %1641 = vmatpush2.msra.mxu0 0.0
        %1642 = vmatprep.subr.mxu0 0.0
        %1643 = vmatpush2.msra.mxu0 0.0
        %1644 = vmatprep.subr.mxu0 0.0
        %1645 = vmatpush2.msra.mxu0 0.0
        %1646 = vmatprep.subr.mxu0 0.0
        %1647 = vmatpush2.msra.mxu0 0.0
        %1648 = vmatprep.subr.mxu0 0.0
        %1649 = vmatpush2.msra.mxu0 0.0
        %1650 = vmatprep.subr.mxu0 0.0
        %1651 = vmatpush2.msra.mxu0 0.0
        %1652 = vmatprep.subr.mxu0 0.0
        %1653 = vmatpush2.msra.mxu0 0.0
        %1654 = vmatprep.mubr.f32.mxu0 0.0
        %1655 = vmatmul.mubr.f32.gmra.mxu0 %v1588
        %v1656 = vpop.f32.mrf.mxu0
        %v1657 = vadd.f32 0.0, %v1656
        %v1658 = vpop.f32.mrf.mxu0
        %v1659 = vadd.f32 0.0, %v1658
        %1660 = vdwg.mxu0
        %v1661 = vsel %vm460, %v1584, 0
        %1663 = vmatprep.subr.mxu0 0.0
        %1664 = vmatpush1.msra.mxu0 0.0
        %1665 = vmatprep.subr.mxu0 0.0
        %1666 = vmatpush1.msra.mxu0 0.0
        %1667 = vmatprep.subr.mxu0 0.0
        %1668 = vmatpush1.msra.mxu0 0.0
        %1669 = vmatprep.subr.mxu0 0.0
        %1670 = vmatpush1.msra.mxu0 0.0
        %1671 = vmatprep.subr.mxu0 0.0
        %1672 = vmatpush1.msra.mxu0 0.0
        %1673 = vmatprep.subr.mxu0 0.0
        %1674 = vmatpush1.msra.mxu0 0.0
        %1675 = vmatprep.subr.mxu0 0.0
        %1676 = vmatpush1.msra.mxu0 0.0
        %1677 = vmatprep.subr.mxu0 0.0
        %1678 = vmatpush1.msra.mxu0 0.0
        %1679 = vmatprep.subr.mxu0 0.0
        %1680 = vmatpush1.msra.mxu0 0.0
        %1681 = vmatprep.subr.mxu0 0.0
        %1682 = vmatpush1.msra.mxu0 0.0
        %1683 = vmatprep.subr.mxu0 0.0
        %1684 = vmatpush1.msra.mxu0 0.0
        %1685 = vmatprep.subr.mxu0 0.0
        %1686 = vmatpush1.msra.mxu0 0.0
        %1687 = vmatprep.subr.mxu0 0.0
        %1688 = vmatpush1.msra.mxu0 0.0
        %1689 = vmatprep.subr.mxu0 0.0
        %1690 = vmatpush1.msra.mxu0 0.0
        %1691 = vmatprep.subr.mxu0 %v1579
        %1692 = vmatpush1.msra.mxu0 %v1578
        %1693 = vmatprep.subr.mxu0 %v1577
        %1694 = vmatpush1.msra.mxu0 %v1576
        %1695 = vmatprep.subr.mxu0 0.0
        %1696 = vmatpush2.msra.mxu0 0.0
        %1697 = vmatprep.subr.mxu0 0.0
        %1698 = vmatpush2.msra.mxu0 0.0
        %1699 = vmatprep.subr.mxu0 0.0
        %1700 = vmatpush2.msra.mxu0 0.0
        %1701 = vmatprep.subr.mxu0 0.0
        %1702 = vmatpush2.msra.mxu0 0.0
        %1703 = vmatprep.subr.mxu0 0.0
        %1704 = vmatpush2.msra.mxu0 0.0
        %1705 = vmatprep.subr.mxu0 0.0
        %1706 = vmatpush2.msra.mxu0 0.0
        %1707 = vmatprep.subr.mxu0 0.0
        %1708 = vmatpush2.msra.mxu0 0.0
        %1709 = vmatprep.subr.mxu0 0.0
        %1710 = vmatpush2.msra.mxu0 0.0
        %1711 = vmatprep.subr.mxu0 0.0
        %1712 = vmatpush2.msra.mxu0 0.0
        %1713 = vmatprep.subr.mxu0 0.0
        %1714 = vmatpush2.msra.mxu0 0.0
        %1715 = vmatprep.subr.mxu0 0.0
        %1716 = vmatpush2.msra.mxu0 0.0
        %1717 = vmatprep.subr.mxu0 0.0
        %1718 = vmatpush2.msra.mxu0 0.0
        %1719 = vmatprep.subr.mxu0 0.0
        %1720 = vmatpush2.msra.mxu0 0.0
        %1721 = vmatprep.subr.mxu0 0.0
        %1722 = vmatpush2.msra.mxu0 0.0
        %1723 = vmatprep.subr.mxu0 0.0
        %1724 = vmatpush2.msra.mxu0 0.0
        %1725 = vmatprep.subr.mxu0 0.0
        %1726 = vmatpush2.msra.mxu0 0.0
        %1727 = vmatprep.mubr.f32.mxu0 0.0
        %1728 = vmatmul.mubr.f32.gmra.mxu0 %v1661
        %v1729 = vpop.f32.mrf.mxu0
        %v1730 = vadd.f32 %v1657, %v1729
        %v1731 = vpop.f32.mrf.mxu0
        %v1732 = vadd.f32 %v1659, %v1731
        %1733 = vdwg.mxu0
        %1734 = vset.pattern.permute.xlu0 2
        %1735 = vperm.xlu0 %1734, %v446
        %v1736 = vpop.permute.xlu0 %1735
        %v1738 = vadd.f32 %v1730, %v1736
        %v1739 = vadd.f32 %v1732, %v1736
        %1740 = vst [vmem:[#allocation2 + $0x8] sm:$0xff] %v1738
        %1741 = vst [vmem:[#allocation2 + $0x10] sm:$0xff] %v1739
        %s1742 = scalar_lea.vmem [#allocation8], 64
        %v1743 = vld [vmem:[%s1742] sm:$0xff]
        %v1744 = vld [vmem:[%s1742 + $0x8] sm:$0xff]
        %v1745 = vmul.f32 %v1738, %v1743
        %v1746 = vmul.f32 %v1739, %v1744
        %v1747 = vld [vmem:[#allocation2] sm:$0xff]
        %v1748 = vld [vmem:[#allocation2 + $0x8] sm:$0xff]
        %v1749 = vld [vmem:[#allocation2 + $0x10] sm:$0xff]
        %v1750 = vld [vmem:[#allocation8] sm:$0xff]
        %v1751 = vld [vmem:[#allocation8 + $0x8] sm:$0xff]
        %1754 = vrot.lane.b32.xlu0 %v1750, 111
        %v1755 = vpop.permute.xlu0 %1754
        %1756 = vrot.lane.b32.xlu0 %v1751, 111
        %v1757 = vpop.permute.xlu0 %1756
        %v1758 = vsel %vm583, %v1755, %v1757
        %v1762 = vmul.f32 %v1747, %v1755
        %v1763 = vmul.f32 %v1748, %v1758
        %v1764 = vmul.f32 %v1749, %v1757
        %1768 = vrot.lane.b32.xlu0 %v1762, 17
        %v1769 = vpop.permute.xlu0 %1768
        %1770 = vrot.lane.b32.xlu0 %v1763, 17
        %v1771 = vpop.permute.xlu0 %1770
        %1772 = vrot.lane.b32.xlu0 %v1764, 17
        %v1773 = vpop.permute.xlu0 %1772
        %v1774 = vsel %vm616, %v1769, %v1771
        %v1775 = vsel %vm616, %v1771, %v1773
        %v1778 = vadd.f32 %v1745, %v1774
        %v1779 = vadd.f32 %v1746, %v1775
        %s1780 = scalar_lea.vmem [#allocation8], 16
        %v1781 = vld [vmem:[%s1780] sm:$0xff]
        %v1782 = vld [vmem:[%s1780 + $0x8] sm:$0xff]
        %1785 = vrot.lane.b32.xlu0 %v1781, 112
        %v1786 = vpop.permute.xlu0 %1785
        %1787 = vrot.lane.b32.xlu0 %v1782, 112
        %v1788 = vpop.permute.xlu0 %1787
        %v1789 = vsel %vm646, %v1786, %v1788
        %v1793 = vmul.f32 %v1747, %v1786
        %v1794 = vmul.f32 %v1748, %v1789
        %v1795 = vmul.f32 %v1749, %v1788
        %1799 = vrot.lane.b32.xlu0 %v1793, 16
        %v1800 = vpop.permute.xlu0 %1799
        %1801 = vrot.lane.b32.xlu0 %v1794, 16
        %v1802 = vpop.permute.xlu0 %1801
        %1803 = vrot.lane.b32.xlu0 %v1795, 16
        %v1804 = vpop.permute.xlu0 %1803
        %v1805 = vsel %vm460, %v1800, %v1802
        %v1806 = vsel %vm460, %v1802, %v1804
        %v1809 = vadd.f32 %v1778, %v1805
        %v1810 = vadd.f32 %v1779, %v1806
        %s1811 = scalar_lea.vmem [#allocation8], 32
        %v1812 = vld [vmem:[%s1811] sm:$0xff]
        %v1813 = vld [vmem:[%s1811 + $0x8] sm:$0xff]
        %1816 = vrot.lane.b32.xlu0 %v1812, 113
        %v1817 = vpop.permute.xlu0 %1816
        %1818 = vrot.lane.b32.xlu0 %v1813, 113
        %v1819 = vpop.permute.xlu0 %1818
        %v1820 = vsel %vm708, %v1817, %v1819
        %v1824 = vmul.f32 %v1747, %v1817
        %v1825 = vmul.f32 %v1748, %v1820
        %v1826 = vmul.f32 %v1749, %v1819
        %1830 = vrot.lane.b32.xlu0 %v1824, 15
        %v1831 = vpop.permute.xlu0 %1830
        %1832 = vrot.lane.b32.xlu0 %v1825, 15
        %v1833 = vpop.permute.xlu0 %1832
        %1834 = vrot.lane.b32.xlu0 %v1826, 15
        %v1835 = vpop.permute.xlu0 %1834
        %v1836 = vsel %vm741, %v1831, %v1833
        %v1837 = vsel %vm741, %v1833, %v1835
        %v1840 = vadd.f32 %v1809, %v1836
        %v1841 = vadd.f32 %v1810, %v1837
        %s1842 = scalar_lea.vmem [#allocation8], 48
        %v1843 = vld [vmem:[%s1842] sm:$0xff]
        %v1844 = vld [vmem:[%s1842 + $0x8] sm:$0xff]
        %1847 = vrot.lane.b32.xlu0 %v1843, 127
        %v1848 = vpop.permute.xlu0 %1847
        %1849 = vrot.lane.b32.xlu0 %v1844, 127
        %v1850 = vpop.permute.xlu0 %1849
        %v1851 = vsel %vm771, %v1848, %v1850
        %v1855 = vmul.f32 %v1747, %v1848
        %v1856 = vmul.f32 %v1748, %v1851
        %v1857 = vmul.f32 %v1749, %v1850
        %1861 = vrot.lane.b32.xlu0 %v1855, 1
        %v1862 = vpop.permute.xlu0 %1861
        %1863 = vrot.lane.b32.xlu0 %v1856, 1
        %v1864 = vpop.permute.xlu0 %1863
        %1865 = vrot.lane.b32.xlu0 %v1857, 1
        %v1866 = vpop.permute.xlu0 %1865
        %v1867 = vsel %vm804, %v1862, %v1864
        %v1868 = vsel %vm804, %v1864, %v1866
        %v1871 = vadd.f32 %v1840, %v1867
        %v1872 = vadd.f32 %v1841, %v1868
        %v1873 = vld [vmem:[#allocation2 + $0x18] sm:$0xff]
        %s1874 = scalar_lea.vmem [#allocation8], 80
        %v1875 = vld [vmem:[%s1874] sm:$0xff]
        %v1876 = vld [vmem:[%s1874 + $0x8] sm:$0xff]
        %1879 = vrot.lane.b32.xlu0 %v1875, 1
        %v1880 = vpop.permute.xlu0 %1879
        %1881 = vrot.lane.b32.xlu0 %v1876, 1
        %v1882 = vpop.permute.xlu0 %1881
        %v1883 = vsel %vm804, %v1880, %v1882
        %v1887 = vmul.f32 %v1748, %v1880
        %v1888 = vmul.f32 %v1749, %v1883
        %v1889 = vmul.f32 %v1873, %v1882
        %1893 = vrot.lane.b32.xlu0 %v1887, 127
        %v1894 = vpop.permute.xlu0 %1893
        %1895 = vrot.lane.b32.xlu0 %v1888, 127
        %v1896 = vpop.permute.xlu0 %1895
        %1897 = vrot.lane.b32.xlu0 %v1889, 127
        %v1898 = vpop.permute.xlu0 %1897
        %v1899 = vsel %vm771, %v1894, %v1896
        %v1900 = vsel %vm771, %v1896, %v1898
        %v1903 = vadd.f32 %v1871, %v1899
        %v1904 = vadd.f32 %v1872, %v1900
        %s1905 = scalar_lea.vmem [#allocation8], 96
        %v1906 = vld [vmem:[%s1905] sm:$0xff]
        %v1907 = vld [vmem:[%s1905 + $0x8] sm:$0xff]
        %1910 = vrot.lane.b32.xlu0 %v1906, 15
        %v1911 = vpop.permute.xlu0 %1910
        %1912 = vrot.lane.b32.xlu0 %v1907, 15
        %v1913 = vpop.permute.xlu0 %1912
        %v1914 = vsel %vm741, %v1911, %v1913
        %v1918 = vmul.f32 %v1748, %v1911
        %v1919 = vmul.f32 %v1749, %v1914
        %v1920 = vmul.f32 %v1873, %v1913
        %1924 = vrot.lane.b32.xlu0 %v1918, 113
        %v1925 = vpop.permute.xlu0 %1924
        %1926 = vrot.lane.b32.xlu0 %v1919, 113
        %v1927 = vpop.permute.xlu0 %1926
        %1928 = vrot.lane.b32.xlu0 %v1920, 113
        %v1929 = vpop.permute.xlu0 %1928
        %v1930 = vsel %vm708, %v1925, %v1927
        %v1931 = vsel %vm708, %v1927, %v1929
        %v1934 = vadd.f32 %v1903, %v1930
        %v1935 = vadd.f32 %v1904, %v1931
        %s1936 = scalar_lea.vmem [#allocation8], 112
        %v1937 = vld [vmem:[%s1936] sm:$0xff]
        %v1938 = vld [vmem:[%s1936 + $0x8] sm:$0xff]
        %1941 = vrot.lane.b32.xlu0 %v1937, 16
        %v1942 = vpop.permute.xlu0 %1941
        %1943 = vrot.lane.b32.xlu0 %v1938, 16
        %v1944 = vpop.permute.xlu0 %1943
        %v1945 = vsel %vm460, %v1942, %v1944
        %v1949 = vmul.f32 %v1748, %v1942
        %v1950 = vmul.f32 %v1749, %v1945
        %v1951 = vmul.f32 %v1873, %v1944
        %1955 = vrot.lane.b32.xlu0 %v1949, 112
        %v1956 = vpop.permute.xlu0 %1955
        %1957 = vrot.lane.b32.xlu0 %v1950, 112
        %v1958 = vpop.permute.xlu0 %1957
        %1959 = vrot.lane.b32.xlu0 %v1951, 112
        %v1960 = vpop.permute.xlu0 %1959
        %v1961 = vsel %vm646, %v1956, %v1958
        %v1962 = vsel %vm646, %v1958, %v1960
        %v1965 = vadd.f32 %v1934, %v1961
        %v1966 = vadd.f32 %v1935, %v1962
        %s1967 = scalar_lea.vmem [#allocation8], 128
        %v1968 = vld [vmem:[%s1967] sm:$0xff]
        %v1969 = vld [vmem:[%s1967 + $0x8] sm:$0xff]
        %1972 = vrot.lane.b32.xlu0 %v1968, 17
        %v1973 = vpop.permute.xlu0 %1972
        %1974 = vrot.lane.b32.xlu0 %v1969, 17
        %v1975 = vpop.permute.xlu0 %1974
        %v1976 = vsel %vm616, %v1973, %v1975
        %v1980 = vmul.f32 %v1748, %v1973
        %v1981 = vmul.f32 %v1749, %v1976
        %v1982 = vmul.f32 %v1873, %v1975
        %1986 = vrot.lane.b32.xlu0 %v1980, 111
        %v1987 = vpop.permute.xlu0 %1986
        %1988 = vrot.lane.b32.xlu0 %v1981, 111
        %v1989 = vpop.permute.xlu0 %1988
        %1990 = vrot.lane.b32.xlu0 %v1982, 111
        %v1991 = vpop.permute.xlu0 %1990
        %v1992 = vsel %vm583, %v1987, %v1989
        %v1993 = vsel %vm583, %v1989, %v1991
        %v1996 = vadd.f32 %v1965, %v1992
        %v1997 = vadd.f32 %v1966, %v1993
        %1998 = vset.pattern.permute.xlu0 3
        %1999 = vperm.xlu0 %1998, %v446
        %v2000 = vpop.permute.xlu0 %1999
        %v2002 = vadd.f32 %v1996, %v2000
        %v2003 = vadd.f32 %v1997, %v2000
        %v2004 = vadd.f32 %v1738, %v438
        %v2005 = vadd.f32 %v1739, %v439
        %2006 = vst [vmem:[%s435] sm:$0xff] %v2004
        %2007 = vst [vmem:[%s435 + $0x8] sm:$0xff] %v2005
        %v2008 = vadd.f32 %v2002, %v440
        %v2009 = vadd.f32 %v2003, %v441
        %2010 = vst [vmem:[%s435 + $0x10] sm:$0xff] %v2008
        %2011 = vst [vmem:[%s435 + $0x18] sm:$0xff] %v2009
        %s2012 = sand.u32 %s252, 1
        %s2013 = scalar_lea.sflag [#allocation5], %s2012
        %s2014 = sand.u32 %s252, 1
        %s2015 = smul.addr %s2014, 32
        %s2016 = scalar_lea.vmem [#allocation12], %s2015
        // Predicated region
        $region81: #{tpu_custom_call.1} parent=59 // pred_check
          %p2017 = pneg %p262
        $region82: #{tpu_custom_call.1} parent=59 // pred_check_branch
          %2019 = sbr.rel (%p2017) target = $region84
        $region83: #{tpu_custom_call.1} parent=59 // pred_region
          %s2020 = smul.u32 2, %s29
          %s2022 = ssub.s32 512, 512
          %2023 = vsyncadd %s2013, %s2022
          %s2024 = smul.addr %s2020, 128
          %s2025 = scalar_lea.hbm %s10, %s2024
          %s2026 = sshll.u32 %s2016, 4
          %s2027 = int_to_ptr.vmem [resolvable:$true] %s2026
          %2032 = dma.vmem_to_hbm [thread:$0]  %s2027, 512, %s2025, %s2013, 256, 512, 16
        $region84: #{tpu_custom_call.1} parent=59 // pred_fallthru
          _
      $region60: #{tpu_custom_call.1} parent=5 // pred_fallthru
        _
      %p2033 = scmp.le.s32.totalorder 2, %s24
      // Predicated region
      $region85: #{tpu_custom_call.1} parent=5 // pred_check
        %p2034 = pneg %p2033
      $region86: #{tpu_custom_call.1} parent=5 // pred_check_branch
        %2036 = sbr.rel (%p2034) target = $region88
      $region87: #{tpu_custom_call.1} parent=5 // pred_region
        %s2037 = ssub.s32 %s24, 2
        // Predicated region
        $region89: #{tpu_custom_call.1} parent=87 // pred_check
          %p2038 = pneg %p268
        $region90: #{tpu_custom_call.1} parent=87 // pred_check_branch
          %2040 = sbr.rel (%p2038) target = $region92
        $region91: #{tpu_custom_call.1} parent=87 // pred_region
          %s2041 = sand.u32 %s253, 1
          %s2042 = scalar_lea.sflag [#allocation5], %s2041
          %s2043 = sand.u32 %s253, 1
          %s2044 = smul.addr %s2043, 32
          %s2045 = scalar_lea.vmem [#allocation12], %s2044
          %2046 = dma.done %s2042, 512
        $region92: #{tpu_custom_call.1} parent=87 // pred_fallthru
          _
      $region88: #{tpu_custom_call.1} parent=5 // pred_fallthru
        _
    $region6: #{tpu_custom_call.1} parent=1 // loop_footer
      %s28 = sadd.s32 1, %s24
    $region7: #{tpu_custom_call.1} parent=1 // loop_footer_branch
      %23 = sbr.rel target = $region3
    $region8: #{tpu_custom_call.1} parent=1 // loop_exit
      _
    %2047 = vsyncpa [#allocation4], 1
    %s2048 = scalar_lea.sflag [#allocation4], 1
    %2049 = vsyncpa %s2048, 1
    %2050 = vsyncpa [#allocation7], 1
    %2051 = vsyncpa [#allocation10], 1
    %2052 = vsyncpa [#allocation5], 1
    %s2053 = scalar_lea.sflag [#allocation5], 1
    %2054 = vsyncpa %s2053, 1

</llo_original>
